<compile_context>
chip_gen: v5e
topology: v5e:2x2
jax: 0.10.0
libtpu: 0.0.40
codegen_flags: <defaults>
</compile_context>

<pallas_src>
import jax
import jax.numpy as jnp
from jax import lax
from jax.experimental import pallas as pl
from jax.experimental.pallas import tpu as pltpu


def _round_up(x, m):
    return ((x + m - 1) // m) * m


# ----------------------------------------------------------------------------
# Fused kernel: multi-layer LSTM over a time chunk + (BN-folded) FC head.
# ----------------------------------------------------------------------------
def _fused_lstm_kernel(x_ref, wih_ref, whh_ref, b_ref, wout_ref, bout_ref,
                       out_ref, xproj_ref, hseq_ref, h_ref, c_ref):
    Tc, bt, I = x_ref.shape                      # x block: (time-chunk, batch-tile, I)
    L, KI, G4 = wih_ref.shape                    # G4 = 4*H (dense gate width)
    H = whh_ref.shape[1]
    tc = pl.program_id(1)
    ntc = pl.num_programs(1)
    unroll = True if Tc <= 16 else 4

    # h/c carries persist across time chunks (scratch survives grid steps).
    @pl.when(tc == 0)
    def _init():
        h_ref[...] = jnp.zeros(h_ref.shape, h_ref.dtype)
        c_ref[...] = jnp.zeros(c_ref.shape, c_ref.dtype)

    for l in range(L):                           # static layer loop (layer-outer)
        # ---- hoisted input projection for the whole chunk: one big MXU matmul ----
        if l == 0:
            inp = x_ref[...].reshape(Tc * bt, I)             # bf16
            in_sz = I
        else:
            inp = hseq_ref[...].reshape(Tc * bt, H)          # bf16 (prev layer's h)
            in_sz = H
        w_in = wih_ref[l]                                    # (KI, 4H) bf16
        if in_sz != KI:
            w_in = w_in[0:in_sz, :]
        proj = jnp.dot(inp, w_in, preferred_element_type=jnp.float32)
        xproj_ref[...] = (proj + b_ref[l]).reshape(Tc, bt, G4)   # bias folded here

        w_hh = whh_ref[l]                                    # (H, 4H) bf16

        # ---- recurrence: only h @ W_hh (K = H) per step ----
        def step(t, carry):
            h, c = carry                                     # f32 (bt, H)
            g = xproj_ref[t] + jnp.dot(h.astype(jnp.bfloat16), w_hh,
                                       preferred_element_type=jnp.float32)
            if G4 <= 128:
                # Dense gates: one sigmoid + one tanh pass over the full gate row.
                sg = jax.nn.sigmoid(g)
                th = jnp.tanh(g)
                i_g = sg[:, 0 * H:1 * H]
                f_g = sg[:, 1 * H:2 * H]
                g_g = th[:, 2 * H:3 * H]
                o_g = sg[:, 3 * H:4 * H]
            else:
                i_g = jax.nn.sigmoid(g[:, 0 * H:1 * H])
                f_g = jax.nn.sigmoid(g[:, 1 * H:2 * H])
                g_g = jnp.tanh(g[:, 2 * H:3 * H])
                o_g = jax.nn.sigmoid(g[:, 3 * H:4 * H])
            c_new = f_g * c + i_g * g_g                      # f32 state
            h_new = o_g * jnp.tanh(c_new)
            hseq_ref[t] = h_new.astype(jnp.bfloat16)         # feeds next layer's proj
            return h_new, c_new

        h_fin, c_fin = lax.fori_loop(0, Tc, step, (h_ref[l], c_ref[l]),
                                     unroll=unroll)
        h_ref[l] = h_fin
        c_ref[l] = c_fin

    # Head (only at the last time chunk): BN folded into (w_out, b_out);
    # FC(hidden -> 1) as VPU multiply + lane reduction (no 1-column MXU matmul).
    @pl.when(tc == ntc - 1)
    def _head():
        h_last = h_ref[L - 1]                                # (bt, H) f32
        out_ref[...] = (jnp.sum(h_last * wout_ref[...], axis=-1, keepdims=True)
                        + bout_ref[...])


def fused_lstm_regressor(x_pad, wih, whh, b_all, w_out, b_out, *, bt, Tc):
    """x_pad: (T, BP, I) time-major, bf16, batch padded to multiple of bt."""
    T, BP, I = x_pad.shape
    nb, ntc = BP // bt, T // Tc
    L, KI, G4 = wih.shape
    H = whh.shape[1]
    return pl.pallas_call(
        _fused_lstm_kernel,
        out_shape=jax.ShapeDtypeStruct((BP, 1), jnp.float32),
        grid_spec=pltpu.PrefetchScalarGridSpec(
            num_scalar_prefetch=0,
            grid=(nb, ntc),                         # batch (parallel), time (arbitrary)
            in_specs=[
                pl.BlockSpec((Tc, bt, I), lambda b, t: (t, b, 0)),
                pl.BlockSpec(wih.shape, lambda b, t: (0, 0, 0)),
                pl.BlockSpec(whh.shape, lambda b, t: (0, 0, 0)),
                pl.BlockSpec(b_all.shape, lambda b, t: (0, 0, 0)),
                pl.BlockSpec(w_out.shape, lambda b, t: (0, 0)),
                pl.BlockSpec(b_out.shape, lambda b, t: (0, 0)),
            ],
            out_specs=pl.BlockSpec((bt, 1), lambda b, t: (b, 0)),
            scratch_shapes=[
                pltpu.VMEM((Tc, bt, G4), jnp.float32),    # hoisted input projection
                pltpu.VMEM((Tc, bt, H), jnp.bfloat16),    # per-layer h sequence
                pltpu.VMEM((L, bt, H), jnp.float32),      # h carry (persists over tc)
                pltpu.VMEM((L, bt, H), jnp.float32),      # c carry (persists over tc)
            ],
        ),
        compiler_params=pltpu.CompilerParams(
            dimension_semantics=("parallel", "arbitrary")),
    )(x_pad, wih, whh, b_all, w_out, b_out)


# ----------------------------------------------------------------------------
# Parameter construction (torch-layout) and packing.
# ----------------------------------------------------------------------------
def init_params(key, input_size, hidden_size, num_layers):
    H = hidden_size
    params = {"lstm": []}
    for layer in range(num_layers):
        in_sz = input_size if layer == 0 else H
        key, k1, k2, k3, k4 = jax.random.split(key, 5)
        std_ih = (2.0 / (4 * H + in_sz)) ** 0.5          # xavier_normal
        w_ih = std_ih * jax.random.normal(k1, (4 * H, in_sz), jnp.float32)
        a = jax.random.normal(k2, (4 * H, H), jnp.float32)
        q, _ = jnp.linalg.qr(a)                          # orthogonal
        w_hh = q
        bound = 1.0 / (H ** 0.5)                         # torch default bias init
        b_ih = jax.random.uniform(k3, (4 * H,), jnp.float32, -bound, bound)
        b_hh = jax.random.uniform(k4, (4 * H,), jnp.float32, -bound, bound)
        params["lstm"].append((w_ih, w_hh, b_ih, b_hh))

    # BatchNorm1d(H): gamma=1, beta=0, running_mean=0, running_var=1
    params["bn"] = (jnp.ones((H,), jnp.float32), jnp.zeros((H,), jnp.float32),
                    jnp.zeros((H,), jnp.float32), jnp.ones((H,), jnp.float32))

    key, k5, k6 = jax.random.split(key, 3)
    bound = 1.0 / (H ** 0.5)
    w_fc = jax.random.uniform(k5, (1, H), jnp.float32, -bound, bound)
    b_fc = jax.random.uniform(k6, (1,), jnp.float32, -bound, bound)
    params["fc"] = (w_fc, b_fc)
    return params


def pack_params(params, input_size, hidden_size):
    """Dense gate layout (4*H wide), bf16 weights, BN folded into the FC head."""
    H, I = hidden_size, input_size
    L = len(params["lstm"])
    G4 = 4 * H
    KI = _round_up(max(I, H), 8)

    wih = jnp.zeros((L, KI, G4), jnp.float32)
    whh = jnp.zeros((L, H, G4), jnp.float32)
    b_all = jnp.zeros((L, 1, G4), jnp.float32)
    for l, (w_ih, w_hh, b_ih, b_hh) in enumerate(params["lstm"]):
        in_sz = I if l == 0 else H
        wih = wih.at[l, :in_sz, :].set(w_ih.T)     # torch gate order i|f|g|o preserved
        whh = whh.at[l].set(w_hh.T)
        b_all = b_all.at[l, 0, :].set(b_ih + b_hh)

    # Fold eval-mode BatchNorm into the FC layer:
    #   y = (h - mean) * rsqrt(var + eps) * gamma + beta;  out = y @ w^T + b
    gamma, beta, mean, var = params["bn"]
    w_fc, b_fc = params["fc"]
    scale = gamma * lax.rsqrt(var + 1e-5)
    shift = beta - mean * scale
    w_vec = w_fc[0]
    w_out = (w_vec * scale).reshape(1, H).astype(jnp.float32)
    b_out = jnp.full((1, 1), b_fc[0] + jnp.sum(shift * w_vec), jnp.float32)

    return {"wih": wih.astype(jnp.bfloat16), "whh": whh.astype(jnp.bfloat16),
            "b": b_all, "w_out": w_out, "b_out": b_out,
            "H": H, "I": I, "L": L, "KI": KI, "G4": G4}


# ----------------------------------------------------------------------------
# Tiling heuristics + wrapper.
# ----------------------------------------------------------------------------
def _chunk_vmem_bytes(Tc, bt, I, H, L):
    G4 = 4 * H
    x_blk = 2 * Tc * bt * I * 2          # x block, bf16, double-buffered
    xproj = Tc * bt * G4 * 4
    hseq = Tc * bt * H * 2
    state = 2 * L * bt * H * 4
    return x_blk + xproj + hseq + state


def _pick_time_chunk(T, bt, I, H, L, max_chunk=64, budget=8 * 1024 * 1024):
    best = 1
    for d in range(1, min(T, max_chunk) + 1):
        if T % d == 0 and _chunk_vmem_bytes(d, bt, I, H, L) <= budget:
            best = d
    return best


def lstm_regressor_forward(packed, x, *, batch_tile=None, max_time_chunk=64):
    """x: (batch, seq, input_size) batch_first. Returns (batch, 1) f32."""
    H, I, L = packed["H"], packed["I"], packed["L"]
    B, T, I_in = x.shape
    assert I_in == I
    # Time-major; bf16 MXU operands.  Feature dim stays = I (no lane padding in HBM).
    x_tbi = jnp.transpose(x.astype(jnp.float32), (1, 0, 2)).astype(jnp.bfloat16)

    BP = _round_up(B, 8)
    if batch_tile is None:
        bt = min(BP, 128)
        if BP >= 16:                              # >= 2 batch programs for v7x's 2 TCs
            bt = min(bt, max(8, (BP // 2) // 8 * 8))
    else:
        bt = batch_tile
    bt = max(8, min(_round_up(bt, 8), BP))
    BP = _round_up(BP, bt)

    Tc = _pick_time_chunk(T, bt, I, H, L, max_chunk=max_time_chunk)

    x_pad = jnp.pad(x_tbi, ((0, 0), (0, BP - B), (0, 0)))
    out = fused_lstm_regressor(x_pad, packed["wih"], packed["whh"], packed["b"],
                               packed["w_out"], packed["b_out"], bt=bt, Tc=Tc)
    return out[:B]


# ----------------------------------------------------------------------------
# Pure-JAX reference (matmul_dtype=bf16 mirrors the kernel's MXU operand cast).
# ----------------------------------------------------------------------------
def reference_forward(params, x, matmul_dtype=jnp.float32):
    def mm(a, b):
        return jnp.dot(a.astype(matmul_dtype), b.astype(matmul_dtype),
                       preferred_element_type=jnp.float32)

    x = x.astype(jnp.float32)
    B = x.shape[0]
    H = params["bn"][0].shape[0]
    seq = jnp.transpose(x, (1, 0, 2))            # (T, B, I)
    for (w_ih, w_hh, b_ih, b_hh) in params["lstm"]:
        T = seq.shape[0]
        h = jnp.zeros((B, H), jnp.float32)
        c = jnp.zeros((B, H), jnp.float32)
        ys = []
        for t in range(T):
            g = mm(seq[t], w_ih.T) + mm(h, w_hh.T) + b_ih + b_hh
            i = jax.nn.sigmoid(g[:, 0 * H:1 * H])
            f = jax.nn.sigmoid(g[:, 1 * H:2 * H])
            gg = jnp.tanh(g[:, 2 * H:3 * H])
            o = jax.nn.sigmoid(g[:, 3 * H:4 * H])
            c = f * c + i * gg
            h = o * jnp.tanh(c)
            ys.append(h)
        seq = jnp.stack(ys)
    h_last = seq[-1]
    gamma, beta, mean, var = params["bn"]
    w_fc, b_fc = params["fc"]
    y = (h_last - mean) * lax.rsqrt(var + 1e-5) * gamma + beta
    return y @ w_fc.T + b_fc                     # dropout = identity in eval


if __name__ == "__main__":
    INPUT_SIZE = 16
    HIDDEN_SIZE = 32
    NUM_LAYERS = 2
    BATCH = 8
    SEQ = 8

    key = jax.random.PRNGKey(0)
    key, kx, kp = jax.random.split(key, 3)
    x = jax.random.normal(kx, (BATCH, SEQ, INPUT_SIZE), jnp.float32)
    params = init_params(kp, INPUT_SIZE, HIDDEN_SIZE, NUM_LAYERS)
    packed = pack_params(params, INPUT_SIZE, HIDDEN_SIZE)

    y = lstm_regressor_forward(packed, x)
    jax.block_until_ready(y)
    assert y.shape == (BATCH, 1), y.shape

    # Tight check vs a reference that uses the same bf16 MXU-operand cast.
    y_ref_bf16 = reference_forward(params, x, matmul_dtype=jnp.bfloat16)
    err_tight = float(jnp.max(jnp.abs(y - y_ref_bf16)))
    assert err_tight < 5e-3, f"mismatch vs bf16-operand reference: {err_tight}"

    # Loose check vs the full-f32 PyTorch-equivalent reference (bf16 rounding drift).
    y_ref = reference_forward(params, x, matmul_dtype=jnp.float32)
    err_loose = float(jnp.max(jnp.abs(y - y_ref)))
    assert err_loose < 1e-1, f"mismatch vs f32 reference: {err_loose}"

    print("KERNEL_OK")
</pallas_src>

<mosaic_0001>
module attributes {stable_mosaic.version = 11 : i64} {
  func.func @_fused_lstm_kernel(%arg0: i32, %arg1: i32, %arg2: memref<8x8x16xbf16, #tpu.memory_space<vmem>>, %arg3: memref<2x32x128xbf16, #tpu.memory_space<vmem>>, %arg4: memref<2x32x128xbf16, #tpu.memory_space<vmem>>, %arg5: memref<2x1x128xf32, #tpu.memory_space<vmem>>, %arg6: memref<1x32xf32, #tpu.memory_space<vmem>>, %arg7: memref<1x1xf32, #tpu.memory_space<vmem>>, %arg8: memref<8x1xf32, #tpu.memory_space<vmem>>, %arg9: memref<8x8x128xf32, #tpu.memory_space<vmem>>, %arg10: memref<8x8x32xbf16, #tpu.memory_space<vmem>>, %arg11: memref<2x8x32xf32, #tpu.memory_space<vmem>>, %arg12: memref<2x8x32xf32, #tpu.memory_space<vmem>>) attributes {dimension_semantics = [#tpu.dimension_semantics<parallel>, #tpu.dimension_semantics<arbitrary>], iteration_bounds = array<i64: 1, 1>, scalar_prefetch = 0 : i64, scratch_operands = 4 : i64, tpu.core_type = #tpu.core_type<tc>, window_params = [{transform_indices = @transform_0, window_bounds = array<i64: 8, 8, 16>}, {pipeline_mode = #tpu.pipeline_mode<synchronous>, transform_indices = @transform_1, window_bounds = array<i64: 2, 32, 128>}, {pipeline_mode = #tpu.pipeline_mode<synchronous>, transform_indices = @transform_2, window_bounds = array<i64: 2, 32, 128>}, {pipeline_mode = #tpu.pipeline_mode<synchronous>, transform_indices = @transform_3, window_bounds = array<i64: 2, 1, 128>}, {pipeline_mode = #tpu.pipeline_mode<synchronous>, transform_indices = @transform_4, window_bounds = array<i64: 1, 32>}, {pipeline_mode = #tpu.pipeline_mode<synchronous>, transform_indices = @transform_5, window_bounds = array<i64: 1, 1>}, {transform_indices = @transform_6, window_bounds = array<i64: 8, 1>}]} {
    %c0_i32 = arith.constant 0 : i32
    %0 = arith.cmpi eq, %arg1, %c0_i32 : i32
    %1 = arith.extui %0 : i1 to i32
    %c0_i32_0 = arith.constant 0 : i32
    %2 = arith.cmpi ne, %1, %c0_i32_0 : i32
    scf.if %2 {
      %cst_162 = arith.constant 0.000000e+00 : f32
      %469 = vector.broadcast %cst_162 : f32 to vector<2x8x32xf32>
      %c0_163 = arith.constant 0 : index
      %c0_164 = arith.constant 0 : index
      %c0_165 = arith.constant 0 : index
      %470 = vector.load %arg11[%c0_163, %c0_164, %c0_165] : memref<2x8x32xf32, #tpu.memory_space<vmem>>, vector<2x8x32xf32>
      tpu.vector_store %arg11[%c0_163, %c0_164, %c0_165], %469 {strides = array<i32>} : memref<2x8x32xf32, #tpu.memory_space<vmem>>, vector<2x8x32xf32>,
      %cst_166 = arith.constant 0.000000e+00 : f32
      %471 = vector.broadcast %cst_166 : f32 to vector<2x8x32xf32>
      %c0_167 = arith.constant 0 : index
      %c0_168 = arith.constant 0 : index
      %c0_169 = arith.constant 0 : index
      %472 = vector.load %arg12[%c0_167, %c0_168, %c0_169] : memref<2x8x32xf32, #tpu.memory_space<vmem>>, vector<2x8x32xf32>
      tpu.vector_store %arg12[%c0_167, %c0_168, %c0_169], %471 {strides = array<i32>} : memref<2x8x32xf32, #tpu.memory_space<vmem>>, vector<2x8x32xf32>,
    } else {
    }
    %c0 = arith.constant 0 : index
    %c0_1 = arith.constant 0 : index
    %c0_2 = arith.constant 0 : index
    %3 = vector.load %arg2[%c0, %c0_1, %c0_2] : memref<8x8x16xbf16, #tpu.memory_space<vmem>>, vector<8x8x16xbf16>
    %4 = vector.shape_cast %3 : vector<8x8x16xbf16> to vector<64x16xbf16>
    %c0_3 = arith.constant 0 : index
    %c0_4 = arith.constant 0 : index
    %c0_5 = arith.constant 0 : index
    %5 = vector.load %arg3[%c0_3, %c0_4, %c0_5] : memref<2x32x128xbf16, #tpu.memory_space<vmem>>, vector<1x32x128xbf16>
    %6 = vector.shape_cast %5 : vector<1x32x128xbf16> to vector<32x128xbf16>
    %7 = vector.extract_strided_slice %6 {offsets = [0, 0], sizes = [16, 128], strides = [1, 1]} : vector<32x128xbf16> to vector<16x128xbf16>
    %cst = arith.constant dense<0.000000e+00> : vector<64x128xf32>
    %8 = tpu.matmul %4, %7, %cst {dimension_numbers = #tpu.dot_dimension_numbers<[1], [0], [0], [1], [0, 0, 1, 1], [], []>} : vector<64x16xbf16>, vector<16x128xbf16>, vector<64x128xf32> -> vector<64x128xf32>
    %c0_6 = arith.constant 0 : index
    %c0_7 = arith.constant 0 : index
    %c0_8 = arith.constant 0 : index
    %9 = vector.load %arg5[%c0_6, %c0_7, %c0_8] : memref<2x1x128xf32, #tpu.memory_space<vmem>>, vector<1x1x128xf32>
    %10 = vector.shape_cast %9 : vector<1x1x128xf32> to vector<1x128xf32>
    %11 = vector.broadcast %10 : vector<1x128xf32> to vector<64x128xf32>
    %12 = arith.addf %8, %11 : vector<64x128xf32>
    %13 = vector.shape_cast %12 : vector<64x128xf32> to vector<8x8x128xf32>
    %c0_9 = arith.constant 0 : index
    %c0_10 = arith.constant 0 : index
    %c0_11 = arith.constant 0 : index
    %14 = vector.load %arg9[%c0_9, %c0_10, %c0_11] : memref<8x8x128xf32, #tpu.memory_space<vmem>>, vector<8x8x128xf32>
    tpu.vector_store %arg9[%c0_9, %c0_10, %c0_11], %13 {strides = array<i32>} : memref<8x8x128xf32, #tpu.memory_space<vmem>>, vector<8x8x128xf32>,
    %c0_12 = arith.constant 0 : index
    %c0_13 = arith.constant 0 : index
    %c0_14 = arith.constant 0 : index
    %15 = vector.load %arg4[%c0_12, %c0_13, %c0_14] : memref<2x32x128xbf16, #tpu.memory_space<vmem>>, vector<1x32x128xbf16>
    %16 = vector.shape_cast %15 : vector<1x32x128xbf16> to vector<32x128xbf16>
    %c0_15 = arith.constant 0 : index
    %c0_16 = arith.constant 0 : index
    %c0_17 = arith.constant 0 : index
    %17 = vector.load %arg11[%c0_15, %c0_16, %c0_17] : memref<2x8x32xf32, #tpu.memory_space<vmem>>, vector<1x8x32xf32>
    %18 = vector.shape_cast %17 : vector<1x8x32xf32> to vector<8x32xf32>
    %c0_18 = arith.constant 0 : index
    %c0_19 = arith.constant 0 : index
    %c0_20 = arith.constant 0 : index
    %19 = vector.load %arg12[%c0_18, %c0_19, %c0_20] : memref<2x8x32xf32, #tpu.memory_space<vmem>>, vector<1x8x32xf32>
    %20 = vector.shape_cast %19 : vector<1x8x32xf32> to vector<8x32xf32>
    %c0_i32_21 = arith.constant 0 : i32
    %21 = arith.index_cast %c0_i32_21 : i32 to index
    %c0_22 = arith.constant 0 : index
    %c0_23 = arith.constant 0 : index
    %22 = vector.load %arg9[%21, %c0_22, %c0_23] : memref<8x8x128xf32, #tpu.memory_space<vmem>>, vector<1x8x128xf32>
    %23 = vector.shape_cast %22 : vector<1x8x128xf32> to vector<8x128xf32>
    %24 = arith.truncf %18 : vector<8x32xf32> to vector<8x32xbf16>
    %cst_24 = arith.constant dense<0.000000e+00> : vector<8x128xf32>
    %25 = tpu.matmul %24, %16, %cst_24 {dimension_numbers = #tpu.dot_dimension_numbers<[1], [0], [0], [1], [0, 0, 1, 1], [], []>} : vector<8x32xbf16>, vector<32x128xbf16>, vector<8x128xf32> -> vector<8x128xf32>
    %26 = arith.addf %23, %25 : vector<8x128xf32>
    %27 = arith.negf %26 : vector<8x128xf32>
    %28 = math.exp %27 : vector<8x128xf32>
    %cst_25 = arith.constant 1.000000e+00 : f32
    %29 = vector.broadcast %cst_25 : f32 to vector<8x128xf32>
    %30 = arith.addf %29, %28 : vector<8x128xf32>
    %31 = arith.divf %29, %30 : vector<8x128xf32>
    %32 = math.tanh %26 : vector<8x128xf32>
    %33 = vector.extract_strided_slice %31 {offsets = [0, 0], sizes = [8, 32], strides = [1, 1]} : vector<8x128xf32> to vector<8x32xf32>
    %34 = vector.extract_strided_slice %31 {offsets = [0, 32], sizes = [8, 32], strides = [1, 1]} : vector<8x128xf32> to vector<8x32xf32>
    %35 = vector.extract_strided_slice %32 {offsets = [0, 64], sizes = [8, 32], strides = [1, 1]} : vector<8x128xf32> to vector<8x32xf32>
    %36 = vector.extract_strided_slice %31 {offsets = [0, 96], sizes = [8, 32], strides = [1, 1]} : vector<8x128xf32> to vector<8x32xf32>
    %37 = arith.mulf %34, %20 : vector<8x32xf32>
    %38 = arith.mulf %33, %35 : vector<8x32xf32>
    %39 = arith.addf %37, %38 : vector<8x32xf32>
    %40 = math.tanh %39 : vector<8x32xf32>
    %41 = arith.mulf %36, %40 : vector<8x32xf32>
    %42 = arith.truncf %41 : vector<8x32xf32> to vector<8x32xbf16>
    %43 = arith.index_cast %c0_i32_21 : i32 to index
    %c0_26 = arith.constant 0 : index
    %c0_27 = arith.constant 0 : index
    %44 = vector.load %arg10[%43, %c0_26, %c0_27] : memref<8x8x32xbf16, #tpu.memory_space<vmem>>, vector<1x8x32xbf16>
    %45 = vector.shape_cast %44 : vector<1x8x32xbf16> to vector<8x32xbf16>
    %46 = vector.shape_cast %42 : vector<8x32xbf16> to vector<1x8x32xbf16>
    tpu.vector_store %arg10[%43, %c0_26, %c0_27], %46 {strides = array<i32>} : memref<8x8x32xbf16, #tpu.memory_space<vmem>>, vector<1x8x32xbf16>,
    %c1_i32 = arith.constant 1 : i32
    %47 = arith.index_cast %c1_i32 : i32 to index
    %c0_28 = arith.constant 0 : index
    %c0_29 = arith.constant 0 : index
    %48 = vector.load %arg9[%47, %c0_28, %c0_29] : memref<8x8x128xf32, #tpu.memory_space<vmem>>, vector<1x8x128xf32>
    %49 = vector.shape_cast %48 : vector<1x8x128xf32> to vector<8x128xf32>
    %50 = arith.truncf %41 : vector<8x32xf32> to vector<8x32xbf16>
    %cst_30 = arith.constant dense<0.000000e+00> : vector<8x128xf32>
    %51 = tpu.matmul %50, %16, %cst_30 {dimension_numbers = #tpu.dot_dimension_numbers<[1], [0], [0], [1], [0, 0, 1, 1], [], []>} : vector<8x32xbf16>, vector<32x128xbf16>, vector<8x128xf32> -> vector<8x128xf32>
    %52 = arith.addf %49, %51 : vector<8x128xf32>
    %53 = arith.negf %52 : vector<8x128xf32>
    %54 = math.exp %53 : vector<8x128xf32>
    %cst_31 = arith.constant 1.000000e+00 : f32
    %55 = vector.broadcast %cst_31 : f32 to vector<8x128xf32>
    %56 = arith.addf %55, %54 : vector<8x128xf32>
    %57 = arith.divf %55, %56 : vector<8x128xf32>
    %58 = math.tanh %52 : vector<8x128xf32>
    %59 = vector.extract_strided_slice %57 {offsets = [0, 0], sizes = [8, 32], strides = [1, 1]} : vector<8x128xf32> to vector<8x32xf32>
    %60 = vector.extract_strided_slice %57 {offsets = [0, 32], sizes = [8, 32], strides = [1, 1]} : vector<8x128xf32> to vector<8x32xf32>
    %61 = vector.extract_strided_slice %58 {offsets = [0, 64], sizes = [8, 32], strides = [1, 1]} : vector<8x128xf32> to vector<8x32xf32>
    %62 = vector.extract_strided_slice %57 {offsets = [0, 96], sizes = [8, 32], strides = [1, 1]} : vector<8x128xf32> to vector<8x32xf32>
    %63 = arith.mulf %60, %39 : vector<8x32xf32>
    %64 = arith.mulf %59, %61 : vector<8x32xf32>
    %65 = arith.addf %63, %64 : vector<8x32xf32>
    %66 = math.tanh %65 : vector<8x32xf32>
    %67 = arith.mulf %62, %66 : vector<8x32xf32>
    %68 = arith.truncf %67 : vector<8x32xf32> to vector<8x32xbf16>
    %69 = arith.index_cast %c1_i32 : i32 to index
    %c0_32 = arith.constant 0 : index
    %c0_33 = arith.constant 0 : index
    %70 = vector.load %arg10[%69, %c0_32, %c0_33] : memref<8x8x32xbf16, #tpu.memory_space<vmem>>, vector<1x8x32xbf16>
    %71 = vector.shape_cast %70 : vector<1x8x32xbf16> to vector<8x32xbf16>
    %72 = vector.shape_cast %68 : vector<8x32xbf16> to vector<1x8x32xbf16>
    tpu.vector_store %arg10[%69, %c0_32, %c0_33], %72 {strides = array<i32>} : memref<8x8x32xbf16, #tpu.memory_space<vmem>>, vector<1x8x32xbf16>,
    %c2_i32 = arith.constant 2 : i32
    %73 = arith.index_cast %c2_i32 : i32 to index
    %c0_34 = arith.constant 0 : index
    %c0_35 = arith.constant 0 : index
    %74 = vector.load %arg9[%73, %c0_34, %c0_35] : memref<8x8x128xf32, #tpu.memory_space<vmem>>, vector<1x8x128xf32>
    %75 = vector.shape_cast %74 : vector<1x8x128xf32> to vector<8x128xf32>
    %76 = arith.truncf %67 : vector<8x32xf32> to vector<8x32xbf16>
    %cst_36 = arith.constant dense<0.000000e+00> : vector<8x128xf32>
    %77 = tpu.matmul %76, %16, %cst_36 {dimension_numbers = #tpu.dot_dimension_numbers<[1], [0], [0], [1], [0, 0, 1, 1], [], []>} : vector<8x32xbf16>, vector<32x128xbf16>, vector<8x128xf32> -> vector<8x128xf32>
    %78 = arith.addf %75, %77 : vector<8x128xf32>
    %79 = arith.negf %78 : vector<8x128xf32>
    %80 = math.exp %79 : vector<8x128xf32>
    %cst_37 = arith.constant 1.000000e+00 : f32
    %81 = vector.broadcast %cst_37 : f32 to vector<8x128xf32>
    %82 = arith.addf %81, %80 : vector<8x128xf32>
    %83 = arith.divf %81, %82 : vector<8x128xf32>
    %84 = math.tanh %78 : vector<8x128xf32>
    %85 = vector.extract_strided_slice %83 {offsets = [0, 0], sizes = [8, 32], strides = [1, 1]} : vector<8x128xf32> to vector<8x32xf32>
    %86 = vector.extract_strided_slice %83 {offsets = [0, 32], sizes = [8, 32], strides = [1, 1]} : vector<8x128xf32> to vector<8x32xf32>
    %87 = vector.extract_strided_slice %84 {offsets = [0, 64], sizes = [8, 32], strides = [1, 1]} : vector<8x128xf32> to vector<8x32xf32>
    %88 = vector.extract_strided_slice %83 {offsets = [0, 96], sizes = [8, 32], strides = [1, 1]} : vector<8x128xf32> to vector<8x32xf32>
    %89 = arith.mulf %86, %65 : vector<8x32xf32>
    %90 = arith.mulf %85, %87 : vector<8x32xf32>
    %91 = arith.addf %89, %90 : vector<8x32xf32>
    %92 = math.tanh %91 : vector<8x32xf32>
    %93 = arith.mulf %88, %92 : vector<8x32xf32>
    %94 = arith.truncf %93 : vector<8x32xf32> to vector<8x32xbf16>
    %95 = arith.index_cast %c2_i32 : i32 to index
    %c0_38 = arith.constant 0 : index
    %c0_39 = arith.constant 0 : index
    %96 = vector.load %arg10[%95, %c0_38, %c0_39] : memref<8x8x32xbf16, #tpu.memory_space<vmem>>, vector<1x8x32xbf16>
    %97 = vector.shape_cast %96 : vector<1x8x32xbf16> to vector<8x32xbf16>
    %98 = vector.shape_cast %94 : vector<8x32xbf16> to vector<1x8x32xbf16>
    tpu.vector_store %arg10[%95, %c0_38, %c0_39], %98 {strides = array<i32>} : memref<8x8x32xbf16, #tpu.memory_space<vmem>>, vector<1x8x32xbf16>,
    %c3_i32 = arith.constant 3 : i32
    %99 = arith.index_cast %c3_i32 : i32 to index
    %c0_40 = arith.constant 0 : index
    %c0_41 = arith.constant 0 : index
    %100 = vector.load %arg9[%99, %c0_40, %c0_41] : memref<8x8x128xf32, #tpu.memory_space<vmem>>, vector<1x8x128xf32>
    %101 = vector.shape_cast %100 : vector<1x8x128xf32> to vector<8x128xf32>
    %102 = arith.truncf %93 : vector<8x32xf32> to vector<8x32xbf16>
    %cst_42 = arith.constant dense<0.000000e+00> : vector<8x128xf32>
    %103 = tpu.matmul %102, %16, %cst_42 {dimension_numbers = #tpu.dot_dimension_numbers<[1], [0], [0], [1], [0, 0, 1, 1], [], []>} : vector<8x32xbf16>, vector<32x128xbf16>, vector<8x128xf32> -> vector<8x128xf32>
    %104 = arith.addf %101, %103 : vector<8x128xf32>
    %105 = arith.negf %104 : vector<8x128xf32>
    %106 = math.exp %105 : vector<8x128xf32>
    %cst_43 = arith.constant 1.000000e+00 : f32
    %107 = vector.broadcast %cst_43 : f32 to vector<8x128xf32>
    %108 = arith.addf %107, %106 : vector<8x128xf32>
    %109 = arith.divf %107, %108 : vector<8x128xf32>
    %110 = math.tanh %104 : vector<8x128xf32>
    %111 = vector.extract_strided_slice %109 {offsets = [0, 0], sizes = [8, 32], strides = [1, 1]} : vector<8x128xf32> to vector<8x32xf32>
    %112 = vector.extract_strided_slice %109 {offsets = [0, 32], sizes = [8, 32], strides = [1, 1]} : vector<8x128xf32> to vector<8x32xf32>
    %113 = vector.extract_strided_slice %110 {offsets = [0, 64], sizes = [8, 32], strides = [1, 1]} : vector<8x128xf32> to vector<8x32xf32>
    %114 = vector.extract_strided_slice %109 {offsets = [0, 96], sizes = [8, 32], strides = [1, 1]} : vector<8x128xf32> to vector<8x32xf32>
    %115 = arith.mulf %112, %91 : vector<8x32xf32>
    %116 = arith.mulf %111, %113 : vector<8x32xf32>
    %117 = arith.addf %115, %116 : vector<8x32xf32>
    %118 = math.tanh %117 : vector<8x32xf32>
    %119 = arith.mulf %114, %118 : vector<8x32xf32>
    %120 = arith.truncf %119 : vector<8x32xf32> to vector<8x32xbf16>
    %121 = arith.index_cast %c3_i32 : i32 to index
    %c0_44 = arith.constant 0 : index
    %c0_45 = arith.constant 0 : index
    %122 = vector.load %arg10[%121, %c0_44, %c0_45] : memref<8x8x32xbf16, #tpu.memory_space<vmem>>, vector<1x8x32xbf16>
    %123 = vector.shape_cast %122 : vector<1x8x32xbf16> to vector<8x32xbf16>
    %124 = vector.shape_cast %120 : vector<8x32xbf16> to vector<1x8x32xbf16>
    tpu.vector_store %arg10[%121, %c0_44, %c0_45], %124 {strides = array<i32>} : memref<8x8x32xbf16, #tpu.memory_space<vmem>>, vector<1x8x32xbf16>,
    %c4_i32 = arith.constant 4 : i32
    %125 = arith.index_cast %c4_i32 : i32 to index
    %c0_46 = arith.constant 0 : index
    %c0_47 = arith.constant 0 : index
    %126 = vector.load %arg9[%125, %c0_46, %c0_47] : memref<8x8x128xf32, #tpu.memory_space<vmem>>, vector<1x8x128xf32>
    %127 = vector.shape_cast %126 : vector<1x8x128xf32> to vector<8x128xf32>
    %128 = arith.truncf %119 : vector<8x32xf32> to vector<8x32xbf16>
    %cst_48 = arith.constant dense<0.000000e+00> : vector<8x128xf32>
    %129 = tpu.matmul %128, %16, %cst_48 {dimension_numbers = #tpu.dot_dimension_numbers<[1], [0], [0], [1], [0, 0, 1, 1], [], []>} : vector<8x32xbf16>, vector<32x128xbf16>, vector<8x128xf32> -> vector<8x128xf32>
    %130 = arith.addf %127, %129 : vector<8x128xf32>
    %131 = arith.negf %130 : vector<8x128xf32>
    %132 = math.exp %131 : vector<8x128xf32>
    %cst_49 = arith.constant 1.000000e+00 : f32
    %133 = vector.broadcast %cst_49 : f32 to vector<8x128xf32>
    %134 = arith.addf %133, %132 : vector<8x128xf32>
    %135 = arith.divf %133, %134 : vector<8x128xf32>
    %136 = math.tanh %130 : vector<8x128xf32>
    %137 = vector.extract_strided_slice %135 {offsets = [0, 0], sizes = [8, 32], strides = [1, 1]} : vector<8x128xf32> to vector<8x32xf32>
    %138 = vector.extract_strided_slice %135 {offsets = [0, 32], sizes = [8, 32], strides = [1, 1]} : vector<8x128xf32> to vector<8x32xf32>
    %139 = vector.extract_strided_slice %136 {offsets = [0, 64], sizes = [8, 32], strides = [1, 1]} : vector<8x128xf32> to vector<8x32xf32>
    %140 = vector.extract_strided_slice %135 {offsets = [0, 96], sizes = [8, 32], strides = [1, 1]} : vector<8x128xf32> to vector<8x32xf32>
    %141 = arith.mulf %138, %117 : vector<8x32xf32>
    %142 = arith.mulf %137, %139 : vector<8x32xf32>
    %143 = arith.addf %141, %142 : vector<8x32xf32>
    %144 = math.tanh %143 : vector<8x32xf32>
    %145 = arith.mulf %140, %144 : vector<8x32xf32>
    %146 = arith.truncf %145 : vector<8x32xf32> to vector<8x32xbf16>
    %147 = arith.index_cast %c4_i32 : i32 to index
    %c0_50 = arith.constant 0 : index
    %c0_51 = arith.constant 0 : index
    %148 = vector.load %arg10[%147, %c0_50, %c0_51] : memref<8x8x32xbf16, #tpu.memory_space<vmem>>, vector<1x8x32xbf16>
    %149 = vector.shape_cast %148 : vector<1x8x32xbf16> to vector<8x32xbf16>
    %150 = vector.shape_cast %146 : vector<8x32xbf16> to vector<1x8x32xbf16>
    tpu.vector_store %arg10[%147, %c0_50, %c0_51], %150 {strides = array<i32>} : memref<8x8x32xbf16, #tpu.memory_space<vmem>>, vector<1x8x32xbf16>,
    %c5_i32 = arith.constant 5 : i32
    %151 = arith.index_cast %c5_i32 : i32 to index
    %c0_52 = arith.constant 0 : index
    %c0_53 = arith.constant 0 : index
    %152 = vector.load %arg9[%151, %c0_52, %c0_53] : memref<8x8x128xf32, #tpu.memory_space<vmem>>, vector<1x8x128xf32>
    %153 = vector.shape_cast %152 : vector<1x8x128xf32> to vector<8x128xf32>
    %154 = arith.truncf %145 : vector<8x32xf32> to vector<8x32xbf16>
    %cst_54 = arith.constant dense<0.000000e+00> : vector<8x128xf32>
    %155 = tpu.matmul %154, %16, %cst_54 {dimension_numbers = #tpu.dot_dimension_numbers<[1], [0], [0], [1], [0, 0, 1, 1], [], []>} : vector<8x32xbf16>, vector<32x128xbf16>, vector<8x128xf32> -> vector<8x128xf32>
    %156 = arith.addf %153, %155 : vector<8x128xf32>
    %157 = arith.negf %156 : vector<8x128xf32>
    %158 = math.exp %157 : vector<8x128xf32>
    %cst_55 = arith.constant 1.000000e+00 : f32
    %159 = vector.broadcast %cst_55 : f32 to vector<8x128xf32>
    %160 = arith.addf %159, %158 : vector<8x128xf32>
    %161 = arith.divf %159, %160 : vector<8x128xf32>
    %162 = math.tanh %156 : vector<8x128xf32>
    %163 = vector.extract_strided_slice %161 {offsets = [0, 0], sizes = [8, 32], strides = [1, 1]} : vector<8x128xf32> to vector<8x32xf32>
    %164 = vector.extract_strided_slice %161 {offsets = [0, 32], sizes = [8, 32], strides = [1, 1]} : vector<8x128xf32> to vector<8x32xf32>
    %165 = vector.extract_strided_slice %162 {offsets = [0, 64], sizes = [8, 32], strides = [1, 1]} : vector<8x128xf32> to vector<8x32xf32>
    %166 = vector.extract_strided_slice %161 {offsets = [0, 96], sizes = [8, 32], strides = [1, 1]} : vector<8x128xf32> to vector<8x32xf32>
    %167 = arith.mulf %164, %143 : vector<8x32xf32>
    %168 = arith.mulf %163, %165 : vector<8x32xf32>
    %169 = arith.addf %167, %168 : vector<8x32xf32>
    %170 = math.tanh %169 : vector<8x32xf32>
    %171 = arith.mulf %166, %170 : vector<8x32xf32>
    %172 = arith.truncf %171 : vector<8x32xf32> to vector<8x32xbf16>
    %173 = arith.index_cast %c5_i32 : i32 to index
    %c0_56 = arith.constant 0 : index
    %c0_57 = arith.constant 0 : index
    %174 = vector.load %arg10[%173, %c0_56, %c0_57] : memref<8x8x32xbf16, #tpu.memory_space<vmem>>, vector<1x8x32xbf16>
    %175 = vector.shape_cast %174 : vector<1x8x32xbf16> to vector<8x32xbf16>
    %176 = vector.shape_cast %172 : vector<8x32xbf16> to vector<1x8x32xbf16>
    tpu.vector_store %arg10[%173, %c0_56, %c0_57], %176 {strides = array<i32>} : memref<8x8x32xbf16, #tpu.memory_space<vmem>>, vector<1x8x32xbf16>,
    %c6_i32 = arith.constant 6 : i32
    %177 = arith.index_cast %c6_i32 : i32 to index
    %c0_58 = arith.constant 0 : index
    %c0_59 = arith.constant 0 : index
    %178 = vector.load %arg9[%177, %c0_58, %c0_59] : memref<8x8x128xf32, #tpu.memory_space<vmem>>, vector<1x8x128xf32>
    %179 = vector.shape_cast %178 : vector<1x8x128xf32> to vector<8x128xf32>
    %180 = arith.truncf %171 : vector<8x32xf32> to vector<8x32xbf16>
    %cst_60 = arith.constant dense<0.000000e+00> : vector<8x128xf32>
    %181 = tpu.matmul %180, %16, %cst_60 {dimension_numbers = #tpu.dot_dimension_numbers<[1], [0], [0], [1], [0, 0, 1, 1], [], []>} : vector<8x32xbf16>, vector<32x128xbf16>, vector<8x128xf32> -> vector<8x128xf32>
    %182 = arith.addf %179, %181 : vector<8x128xf32>
    %183 = arith.negf %182 : vector<8x128xf32>
    %184 = math.exp %183 : vector<8x128xf32>
    %cst_61 = arith.constant 1.000000e+00 : f32
    %185 = vector.broadcast %cst_61 : f32 to vector<8x128xf32>
    %186 = arith.addf %185, %184 : vector<8x128xf32>
    %187 = arith.divf %185, %186 : vector<8x128xf32>
    %188 = math.tanh %182 : vector<8x128xf32>
    %189 = vector.extract_strided_slice %187 {offsets = [0, 0], sizes = [8, 32], strides = [1, 1]} : vector<8x128xf32> to vector<8x32xf32>
    %190 = vector.extract_strided_slice %187 {offsets = [0, 32], sizes = [8, 32], strides = [1, 1]} : vector<8x128xf32> to vector<8x32xf32>
    %191 = vector.extract_strided_slice %188 {offsets = [0, 64], sizes = [8, 32], strides = [1, 1]} : vector<8x128xf32> to vector<8x32xf32>
    %192 = vector.extract_strided_slice %187 {offsets = [0, 96], sizes = [8, 32], strides = [1, 1]} : vector<8x128xf32> to vector<8x32xf32>
    %193 = arith.mulf %190, %169 : vector<8x32xf32>
    %194 = arith.mulf %189, %191 : vector<8x32xf32>
    %195 = arith.addf %193, %194 : vector<8x32xf32>
    %196 = math.tanh %195 : vector<8x32xf32>
    %197 = arith.mulf %192, %196 : vector<8x32xf32>
    %198 = arith.truncf %197 : vector<8x32xf32> to vector<8x32xbf16>
    %199 = arith.index_cast %c6_i32 : i32 to index
    %c0_62 = arith.constant 0 : index
    %c0_63 = arith.constant 0 : index
    %200 = vector.load %arg10[%199, %c0_62, %c0_63] : memref<8x8x32xbf16, #tpu.memory_space<vmem>>, vector<1x8x32xbf16>
    %201 = vector.shape_cast %200 : vector<1x8x32xbf16> to vector<8x32xbf16>
    %202 = vector.shape_cast %198 : vector<8x32xbf16> to vector<1x8x32xbf16>
    tpu.vector_store %arg10[%199, %c0_62, %c0_63], %202 {strides = array<i32>} : memref<8x8x32xbf16, #tpu.memory_space<vmem>>, vector<1x8x32xbf16>,
    %c7_i32 = arith.constant 7 : i32
    %203 = arith.index_cast %c7_i32 : i32 to index
    %c0_64 = arith.constant 0 : index
    %c0_65 = arith.constant 0 : index
    %204 = vector.load %arg9[%203, %c0_64, %c0_65] : memref<8x8x128xf32, #tpu.memory_space<vmem>>, vector<1x8x128xf32>
    %205 = vector.shape_cast %204 : vector<1x8x128xf32> to vector<8x128xf32>
    %206 = arith.truncf %197 : vector<8x32xf32> to vector<8x32xbf16>
    %cst_66 = arith.constant dense<0.000000e+00> : vector<8x128xf32>
    %207 = tpu.matmul %206, %16, %cst_66 {dimension_numbers = #tpu.dot_dimension_numbers<[1], [0], [0], [1], [0, 0, 1, 1], [], []>} : vector<8x32xbf16>, vector<32x128xbf16>, vector<8x128xf32> -> vector<8x128xf32>
    %208 = arith.addf %205, %207 : vector<8x128xf32>
    %209 = arith.negf %208 : vector<8x128xf32>
    %210 = math.exp %209 : vector<8x128xf32>
    %cst_67 = arith.constant 1.000000e+00 : f32
    %211 = vector.broadcast %cst_67 : f32 to vector<8x128xf32>
    %212 = arith.addf %211, %210 : vector<8x128xf32>
    %213 = arith.divf %211, %212 : vector<8x128xf32>
    %214 = math.tanh %208 : vector<8x128xf32>
    %215 = vector.extract_strided_slice %213 {offsets = [0, 0], sizes = [8, 32], strides = [1, 1]} : vector<8x128xf32> to vector<8x32xf32>
    %216 = vector.extract_strided_slice %213 {offsets = [0, 32], sizes = [8, 32], strides = [1, 1]} : vector<8x128xf32> to vector<8x32xf32>
    %217 = vector.extract_strided_slice %214 {offsets = [0, 64], sizes = [8, 32], strides = [1, 1]} : vector<8x128xf32> to vector<8x32xf32>
    %218 = vector.extract_strided_slice %213 {offsets = [0, 96], sizes = [8, 32], strides = [1, 1]} : vector<8x128xf32> to vector<8x32xf32>
    %219 = arith.mulf %216, %195 : vector<8x32xf32>
    %220 = arith.mulf %215, %217 : vector<8x32xf32>
    %221 = arith.addf %219, %220 : vector<8x32xf32>
    %222 = math.tanh %221 : vector<8x32xf32>
    %223 = arith.mulf %218, %222 : vector<8x32xf32>
    %224 = arith.truncf %223 : vector<8x32xf32> to vector<8x32xbf16>
    %225 = arith.index_cast %c7_i32 : i32 to index
    %c0_68 = arith.constant 0 : index
    %c0_69 = arith.constant 0 : index
    %226 = vector.load %arg10[%225, %c0_68, %c0_69] : memref<8x8x32xbf16, #tpu.memory_space<vmem>>, vector<1x8x32xbf16>
    %227 = vector.shape_cast %226 : vector<1x8x32xbf16> to vector<8x32xbf16>
    %228 = vector.shape_cast %224 : vector<8x32xbf16> to vector<1x8x32xbf16>
    tpu.vector_store %arg10[%225, %c0_68, %c0_69], %228 {strides = array<i32>} : memref<8x8x32xbf16, #tpu.memory_space<vmem>>, vector<1x8x32xbf16>,
    %c8_i32 = arith.constant 8 : i32
    %c0_70 = arith.constant 0 : index
    %c0_71 = arith.constant 0 : index
    %c0_72 = arith.constant 0 : index
    %229 = vector.load %arg11[%c0_70, %c0_71, %c0_72] : memref<2x8x32xf32, #tpu.memory_space<vmem>>, vector<1x8x32xf32>
    %230 = vector.shape_cast %229 : vector<1x8x32xf32> to vector<8x32xf32>
    %231 = vector.shape_cast %223 : vector<8x32xf32> to vector<1x8x32xf32>
    tpu.vector_store %arg11[%c0_70, %c0_71, %c0_72], %231 {strides = array<i32>} : memref<2x8x32xf32, #tpu.memory_space<vmem>>, vector<1x8x32xf32>,
    %c0_73 = arith.constant 0 : index
    %c0_74 = arith.constant 0 : index
    %c0_75 = arith.constant 0 : index
    %232 = vector.load %arg12[%c0_73, %c0_74, %c0_75] : memref<2x8x32xf32, #tpu.memory_space<vmem>>, vector<1x8x32xf32>
    %233 = vector.shape_cast %232 : vector<1x8x32xf32> to vector<8x32xf32>
    %234 = vector.shape_cast %221 : vector<8x32xf32> to vector<1x8x32xf32>
    tpu.vector_store %arg12[%c0_73, %c0_74, %c0_75], %234 {strides = array<i32>} : memref<2x8x32xf32, #tpu.memory_space<vmem>>, vector<1x8x32xf32>,
    %c0_76 = arith.constant 0 : index
    %c0_77 = arith.constant 0 : index
    %c0_78 = arith.constant 0 : index
    %235 = vector.load %arg10[%c0_76, %c0_77, %c0_78] : memref<8x8x32xbf16, #tpu.memory_space<vmem>>, vector<8x8x32xbf16>
    %236 = vector.shape_cast %235 : vector<8x8x32xbf16> to vector<64x32xbf16>
    %c1 = arith.constant 1 : index
    %c0_79 = arith.constant 0 : index
    %c0_80 = arith.constant 0 : index
    %237 = vector.load %arg3[%c1, %c0_79, %c0_80] : memref<2x32x128xbf16, #tpu.memory_space<vmem>>, vector<1x32x128xbf16>
    %238 = vector.shape_cast %237 : vector<1x32x128xbf16> to vector<32x128xbf16>
    %cst_81 = arith.constant dense<0.000000e+00> : vector<64x128xf32>
    %239 = tpu.matmul %236, %238, %cst_81 {dimension_numbers = #tpu.dot_dimension_numbers<[1], [0], [0], [1], [0, 0, 1, 1], [], []>} : vector<64x32xbf16>, vector<32x128xbf16>, vector<64x128xf32> -> vector<64x128xf32>
    %c1_82 = arith.constant 1 : index
    %c0_83 = arith.constant 0 : index
    %c0_84 = arith.constant 0 : index
    %240 = vector.load %arg5[%c1_82, %c0_83, %c0_84] : memref<2x1x128xf32, #tpu.memory_space<vmem>>, vector<1x1x128xf32>
    %241 = vector.shape_cast %240 : vector<1x1x128xf32> to vector<1x128xf32>
    %242 = vector.broadcast %241 : vector<1x128xf32> to vector<64x128xf32>
    %243 = arith.addf %239, %242 : vector<64x128xf32>
    %244 = vector.shape_cast %243 : vector<64x128xf32> to vector<8x8x128xf32>
    %c0_85 = arith.constant 0 : index
    %c0_86 = arith.constant 0 : index
    %c0_87 = arith.constant 0 : index
    %245 = vector.load %arg9[%c0_85, %c0_86, %c0_87] : memref<8x8x128xf32, #tpu.memory_space<vmem>>, vector<8x8x128xf32>
    tpu.vector_store %arg9[%c0_85, %c0_86, %c0_87], %244 {strides = array<i32>} : memref<8x8x128xf32, #tpu.memory_space<vmem>>, vector<8x8x128xf32>,
    %c1_88 = arith.constant 1 : index
    %c0_89 = arith.constant 0 : index
    %c0_90 = arith.constant 0 : index
    %246 = vector.load %arg4[%c1_88, %c0_89, %c0_90] : memref<2x32x128xbf16, #tpu.memory_space<vmem>>, vector<1x32x128xbf16>
    %247 = vector.shape_cast %246 : vector<1x32x128xbf16> to vector<32x128xbf16>
    %c1_91 = arith.constant 1 : index
    %c0_92 = arith.constant 0 : index
    %c0_93 = arith.constant 0 : index
    %248 = vector.load %arg11[%c1_91, %c0_92, %c0_93] : memref<2x8x32xf32, #tpu.memory_space<vmem>>, vector<1x8x32xf32>
    %249 = vector.shape_cast %248 : vector<1x8x32xf32> to vector<8x32xf32>
    %c1_94 = arith.constant 1 : index
    %c0_95 = arith.constant 0 : index
    %c0_96 = arith.constant 0 : index
    %250 = vector.load %arg12[%c1_94, %c0_95, %c0_96] : memref<2x8x32xf32, #tpu.memory_space<vmem>>, vector<1x8x32xf32>
    %251 = vector.shape_cast %250 : vector<1x8x32xf32> to vector<8x32xf32>
    %c0_i32_97 = arith.constant 0 : i32
    %252 = arith.index_cast %c0_i32_97 : i32 to index
    %c0_98 = arith.constant 0 : index
    %c0_99 = arith.constant 0 : index
    %253 = vector.load %arg9[%252, %c0_98, %c0_99] : memref<8x8x128xf32, #tpu.memory_space<vmem>>, vector<1x8x128xf32>
    %254 = vector.shape_cast %253 : vector<1x8x128xf32> to vector<8x128xf32>
    %255 = arith.truncf %249 : vector<8x32xf32> to vector<8x32xbf16>
    %cst_100 = arith.constant dense<0.000000e+00> : vector<8x128xf32>
    %256 = tpu.matmul %255, %247, %cst_100 {dimension_numbers = #tpu.dot_dimension_numbers<[1], [0], [0], [1], [0, 0, 1, 1], [], []>} : vector<8x32xbf16>, vector<32x128xbf16>, vector<8x128xf32> -> vector<8x128xf32>
    %257 = arith.addf %254, %256 : vector<8x128xf32>
    %258 = arith.negf %257 : vector<8x128xf32>
    %259 = math.exp %258 : vector<8x128xf32>
    %cst_101 = arith.constant 1.000000e+00 : f32
    %260 = vector.broadcast %cst_101 : f32 to vector<8x128xf32>
    %261 = arith.addf %260, %259 : vector<8x128xf32>
    %262 = arith.divf %260, %261 : vector<8x128xf32>
    %263 = math.tanh %257 : vector<8x128xf32>
    %264 = vector.extract_strided_slice %262 {offsets = [0, 0], sizes = [8, 32], strides = [1, 1]} : vector<8x128xf32> to vector<8x32xf32>
    %265 = vector.extract_strided_slice %262 {offsets = [0, 32], sizes = [8, 32], strides = [1, 1]} : vector<8x128xf32> to vector<8x32xf32>
    %266 = vector.extract_strided_slice %263 {offsets = [0, 64], sizes = [8, 32], strides = [1, 1]} : vector<8x128xf32> to vector<8x32xf32>
    %267 = vector.extract_strided_slice %262 {offsets = [0, 96], sizes = [8, 32], strides = [1, 1]} : vector<8x128xf32> to vector<8x32xf32>
    %268 = arith.mulf %265, %251 : vector<8x32xf32>
    %269 = arith.mulf %264, %266 : vector<8x32xf32>
    %270 = arith.addf %268, %269 : vector<8x32xf32>
    %271 = math.tanh %270 : vector<8x32xf32>
    %272 = arith.mulf %267, %271 : vector<8x32xf32>
    %273 = arith.truncf %272 : vector<8x32xf32> to vector<8x32xbf16>
    %274 = arith.index_cast %c0_i32_97 : i32 to index
    %c0_102 = arith.constant 0 : index
    %c0_103 = arith.constant 0 : index
    %275 = vector.load %arg10[%274, %c0_102, %c0_103] : memref<8x8x32xbf16, #tpu.memory_space<vmem>>, vector<1x8x32xbf16>
    %276 = vector.shape_cast %275 : vector<1x8x32xbf16> to vector<8x32xbf16>
    %277 = vector.shape_cast %273 : vector<8x32xbf16> to vector<1x8x32xbf16>
    tpu.vector_store %arg10[%274, %c0_102, %c0_103], %277 {strides = array<i32>} : memref<8x8x32xbf16, #tpu.memory_space<vmem>>, vector<1x8x32xbf16>,
    %c1_i32_104 = arith.constant 1 : i32
    %278 = arith.index_cast %c1_i32_104 : i32 to index
    %c0_105 = arith.constant 0 : index
    %c0_106 = arith.constant 0 : index
    %279 = vector.load %arg9[%278, %c0_105, %c0_106] : memref<8x8x128xf32, #tpu.memory_space<vmem>>, vector<1x8x128xf32>
    %280 = vector.shape_cast %279 : vector<1x8x128xf32> to vector<8x128xf32>
    %281 = arith.truncf %272 : vector<8x32xf32> to vector<8x32xbf16>
    %cst_107 = arith.constant dense<0.000000e+00> : vector<8x128xf32>
    %282 = tpu.matmul %281, %247, %cst_107 {dimension_numbers = #tpu.dot_dimension_numbers<[1], [0], [0], [1], [0, 0, 1, 1], [], []>} : vector<8x32xbf16>, vector<32x128xbf16>, vector<8x128xf32> -> vector<8x128xf32>
    %283 = arith.addf %280, %282 : vector<8x128xf32>
    %284 = arith.negf %283 : vector<8x128xf32>
    %285 = math.exp %284 : vector<8x128xf32>
    %cst_108 = arith.constant 1.000000e+00 : f32
    %286 = vector.broadcast %cst_108 : f32 to vector<8x128xf32>
    %287 = arith.addf %286, %285 : vector<8x128xf32>
    %288 = arith.divf %286, %287 : vector<8x128xf32>
    %289 = math.tanh %283 : vector<8x128xf32>
    %290 = vector.extract_strided_slice %288 {offsets = [0, 0], sizes = [8, 32], strides = [1, 1]} : vector<8x128xf32> to vector<8x32xf32>
    %291 = vector.extract_strided_slice %288 {offsets = [0, 32], sizes = [8, 32], strides = [1, 1]} : vector<8x128xf32> to vector<8x32xf32>
    %292 = vector.extract_strided_slice %289 {offsets = [0, 64], sizes = [8, 32], strides = [1, 1]} : vector<8x128xf32> to vector<8x32xf32>
    %293 = vector.extract_strided_slice %288 {offsets = [0, 96], sizes = [8, 32], strides = [1, 1]} : vector<8x128xf32> to vector<8x32xf32>
    %294 = arith.mulf %291, %270 : vector<8x32xf32>
    %295 = arith.mulf %290, %292 : vector<8x32xf32>
    %296 = arith.addf %294, %295 : vector<8x32xf32>
    %297 = math.tanh %296 : vector<8x32xf32>
    %298 = arith.mulf %293, %297 : vector<8x32xf32>
    %299 = arith.truncf %298 : vector<8x32xf32> to vector<8x32xbf16>
    %300 = arith.index_cast %c1_i32_104 : i32 to index
    %c0_109 = arith.constant 0 : index
    %c0_110 = arith.constant 0 : index
    %301 = vector.load %arg10[%300, %c0_109, %c0_110] : memref<8x8x32xbf16, #tpu.memory_space<vmem>>, vector<1x8x32xbf16>
    %302 = vector.shape_cast %301 : vector<1x8x32xbf16> to vector<8x32xbf16>
    %303 = vector.shape_cast %299 : vector<8x32xbf16> to vector<1x8x32xbf16>
    tpu.vector_store %arg10[%300, %c0_109, %c0_110], %303 {strides = array<i32>} : memref<8x8x32xbf16, #tpu.memory_space<vmem>>, vector<1x8x32xbf16>,
    %c2_i32_111 = arith.constant 2 : i32
    %304 = arith.index_cast %c2_i32_111 : i32 to index
    %c0_112 = arith.constant 0 : index
    %c0_113 = arith.constant 0 : index
    %305 = vector.load %arg9[%304, %c0_112, %c0_113] : memref<8x8x128xf32, #tpu.memory_space<vmem>>, vector<1x8x128xf32>
    %306 = vector.shape_cast %305 : vector<1x8x128xf32> to vector<8x128xf32>
    %307 = arith.truncf %298 : vector<8x32xf32> to vector<8x32xbf16>
    %cst_114 = arith.constant dense<0.000000e+00> : vector<8x128xf32>
    %308 = tpu.matmul %307, %247, %cst_114 {dimension_numbers = #tpu.dot_dimension_numbers<[1], [0], [0], [1], [0, 0, 1, 1], [], []>} : vector<8x32xbf16>, vector<32x128xbf16>, vector<8x128xf32> -> vector<8x128xf32>
    %309 = arith.addf %306, %308 : vector<8x128xf32>
    %310 = arith.negf %309 : vector<8x128xf32>
    %311 = math.exp %310 : vector<8x128xf32>
    %cst_115 = arith.constant 1.000000e+00 : f32
    %312 = vector.broadcast %cst_115 : f32 to vector<8x128xf32>
    %313 = arith.addf %312, %311 : vector<8x128xf32>
    %314 = arith.divf %312, %313 : vector<8x128xf32>
    %315 = math.tanh %309 : vector<8x128xf32>
    %316 = vector.extract_strided_slice %314 {offsets = [0, 0], sizes = [8, 32], strides = [1, 1]} : vector<8x128xf32> to vector<8x32xf32>
    %317 = vector.extract_strided_slice %314 {offsets = [0, 32], sizes = [8, 32], strides = [1, 1]} : vector<8x128xf32> to vector<8x32xf32>
    %318 = vector.extract_strided_slice %315 {offsets = [0, 64], sizes = [8, 32], strides = [1, 1]} : vector<8x128xf32> to vector<8x32xf32>
    %319 = vector.extract_strided_slice %314 {offsets = [0, 96], sizes = [8, 32], strides = [1, 1]} : vector<8x128xf32> to vector<8x32xf32>
    %320 = arith.mulf %317, %296 : vector<8x32xf32>
    %321 = arith.mulf %316, %318 : vector<8x32xf32>
    %322 = arith.addf %320, %321 : vector<8x32xf32>
    %323 = math.tanh %322 : vector<8x32xf32>
    %324 = arith.mulf %319, %323 : vector<8x32xf32>
    %325 = arith.truncf %324 : vector<8x32xf32> to vector<8x32xbf16>
    %326 = arith.index_cast %c2_i32_111 : i32 to index
    %c0_116 = arith.constant 0 : index
    %c0_117 = arith.constant 0 : index
    %327 = vector.load %arg10[%326, %c0_116, %c0_117] : memref<8x8x32xbf16, #tpu.memory_space<vmem>>, vector<1x8x32xbf16>
    %328 = vector.shape_cast %327 : vector<1x8x32xbf16> to vector<8x32xbf16>
    %329 = vector.shape_cast %325 : vector<8x32xbf16> to vector<1x8x32xbf16>
    tpu.vector_store %arg10[%326, %c0_116, %c0_117], %329 {strides = array<i32>} : memref<8x8x32xbf16, #tpu.memory_space<vmem>>, vector<1x8x32xbf16>,
    %c3_i32_118 = arith.constant 3 : i32
    %330 = arith.index_cast %c3_i32_118 : i32 to index
    %c0_119 = arith.constant 0 : index
    %c0_120 = arith.constant 0 : index
    %331 = vector.load %arg9[%330, %c0_119, %c0_120] : memref<8x8x128xf32, #tpu.memory_space<vmem>>, vector<1x8x128xf32>
    %332 = vector.shape_cast %331 : vector<1x8x128xf32> to vector<8x128xf32>
    %333 = arith.truncf %324 : vector<8x32xf32> to vector<8x32xbf16>
    %cst_121 = arith.constant dense<0.000000e+00> : vector<8x128xf32>
    %334 = tpu.matmul %333, %247, %cst_121 {dimension_numbers = #tpu.dot_dimension_numbers<[1], [0], [0], [1], [0, 0, 1, 1], [], []>} : vector<8x32xbf16>, vector<32x128xbf16>, vector<8x128xf32> -> vector<8x128xf32>
    %335 = arith.addf %332, %334 : vector<8x128xf32>
    %336 = arith.negf %335 : vector<8x128xf32>
    %337 = math.exp %336 : vector<8x128xf32>
    %cst_122 = arith.constant 1.000000e+00 : f32
    %338 = vector.broadcast %cst_122 : f32 to vector<8x128xf32>
    %339 = arith.addf %338, %337 : vector<8x128xf32>
    %340 = arith.divf %338, %339 : vector<8x128xf32>
    %341 = math.tanh %335 : vector<8x128xf32>
    %342 = vector.extract_strided_slice %340 {offsets = [0, 0], sizes = [8, 32], strides = [1, 1]} : vector<8x128xf32> to vector<8x32xf32>
    %343 = vector.extract_strided_slice %340 {offsets = [0, 32], sizes = [8, 32], strides = [1, 1]} : vector<8x128xf32> to vector<8x32xf32>
    %344 = vector.extract_strided_slice %341 {offsets = [0, 64], sizes = [8, 32], strides = [1, 1]} : vector<8x128xf32> to vector<8x32xf32>
    %345 = vector.extract_strided_slice %340 {offsets = [0, 96], sizes = [8, 32], strides = [1, 1]} : vector<8x128xf32> to vector<8x32xf32>
    %346 = arith.mulf %343, %322 : vector<8x32xf32>
    %347 = arith.mulf %342, %344 : vector<8x32xf32>
    %348 = arith.addf %346, %347 : vector<8x32xf32>
    %349 = math.tanh %348 : vector<8x32xf32>
    %350 = arith.mulf %345, %349 : vector<8x32xf32>
    %351 = arith.truncf %350 : vector<8x32xf32> to vector<8x32xbf16>
    %352 = arith.index_cast %c3_i32_118 : i32 to index
    %c0_123 = arith.constant 0 : index
    %c0_124 = arith.constant 0 : index
    %353 = vector.load %arg10[%352, %c0_123, %c0_124] : memref<8x8x32xbf16, #tpu.memory_space<vmem>>, vector<1x8x32xbf16>
    %354 = vector.shape_cast %353 : vector<1x8x32xbf16> to vector<8x32xbf16>
    %355 = vector.shape_cast %351 : vector<8x32xbf16> to vector<1x8x32xbf16>
    tpu.vector_store %arg10[%352, %c0_123, %c0_124], %355 {strides = array<i32>} : memref<8x8x32xbf16, #tpu.memory_space<vmem>>, vector<1x8x32xbf16>,
    %c4_i32_125 = arith.constant 4 : i32
    %356 = arith.index_cast %c4_i32_125 : i32 to index
    %c0_126 = arith.constant 0 : index
    %c0_127 = arith.constant 0 : index
    %357 = vector.load %arg9[%356, %c0_126, %c0_127] : memref<8x8x128xf32, #tpu.memory_space<vmem>>, vector<1x8x128xf32>
    %358 = vector.shape_cast %357 : vector<1x8x128xf32> to vector<8x128xf32>
    %359 = arith.truncf %350 : vector<8x32xf32> to vector<8x32xbf16>
    %cst_128 = arith.constant dense<0.000000e+00> : vector<8x128xf32>
    %360 = tpu.matmul %359, %247, %cst_128 {dimension_numbers = #tpu.dot_dimension_numbers<[1], [0], [0], [1], [0, 0, 1, 1], [], []>} : vector<8x32xbf16>, vector<32x128xbf16>, vector<8x128xf32> -> vector<8x128xf32>
    %361 = arith.addf %358, %360 : vector<8x128xf32>
    %362 = arith.negf %361 : vector<8x128xf32>
    %363 = math.exp %362 : vector<8x128xf32>
    %cst_129 = arith.constant 1.000000e+00 : f32
    %364 = vector.broadcast %cst_129 : f32 to vector<8x128xf32>
    %365 = arith.addf %364, %363 : vector<8x128xf32>
    %366 = arith.divf %364, %365 : vector<8x128xf32>
    %367 = math.tanh %361 : vector<8x128xf32>
    %368 = vector.extract_strided_slice %366 {offsets = [0, 0], sizes = [8, 32], strides = [1, 1]} : vector<8x128xf32> to vector<8x32xf32>
    %369 = vector.extract_strided_slice %366 {offsets = [0, 32], sizes = [8, 32], strides = [1, 1]} : vector<8x128xf32> to vector<8x32xf32>
    %370 = vector.extract_strided_slice %367 {offsets = [0, 64], sizes = [8, 32], strides = [1, 1]} : vector<8x128xf32> to vector<8x32xf32>
    %371 = vector.extract_strided_slice %366 {offsets = [0, 96], sizes = [8, 32], strides = [1, 1]} : vector<8x128xf32> to vector<8x32xf32>
    %372 = arith.mulf %369, %348 : vector<8x32xf32>
    %373 = arith.mulf %368, %370 : vector<8x32xf32>
    %374 = arith.addf %372, %373 : vector<8x32xf32>
    %375 = math.tanh %374 : vector<8x32xf32>
    %376 = arith.mulf %371, %375 : vector<8x32xf32>
    %377 = arith.truncf %376 : vector<8x32xf32> to vector<8x32xbf16>
    %378 = arith.index_cast %c4_i32_125 : i32 to index
    %c0_130 = arith.constant 0 : index
    %c0_131 = arith.constant 0 : index
    %379 = vector.load %arg10[%378, %c0_130, %c0_131] : memref<8x8x32xbf16, #tpu.memory_space<vmem>>, vector<1x8x32xbf16>
    %380 = vector.shape_cast %379 : vector<1x8x32xbf16> to vector<8x32xbf16>
    %381 = vector.shape_cast %377 : vector<8x32xbf16> to vector<1x8x32xbf16>
    tpu.vector_store %arg10[%378, %c0_130, %c0_131], %381 {strides = array<i32>} : memref<8x8x32xbf16, #tpu.memory_space<vmem>>, vector<1x8x32xbf16>,
    %c5_i32_132 = arith.constant 5 : i32
    %382 = arith.index_cast %c5_i32_132 : i32 to index
    %c0_133 = arith.constant 0 : index
    %c0_134 = arith.constant 0 : index
    %383 = vector.load %arg9[%382, %c0_133, %c0_134] : memref<8x8x128xf32, #tpu.memory_space<vmem>>, vector<1x8x128xf32>
    %384 = vector.shape_cast %383 : vector<1x8x128xf32> to vector<8x128xf32>
    %385 = arith.truncf %376 : vector<8x32xf32> to vector<8x32xbf16>
    %cst_135 = arith.constant dense<0.000000e+00> : vector<8x128xf32>
    %386 = tpu.matmul %385, %247, %cst_135 {dimension_numbers = #tpu.dot_dimension_numbers<[1], [0], [0], [1], [0, 0, 1, 1], [], []>} : vector<8x32xbf16>, vector<32x128xbf16>, vector<8x128xf32> -> vector<8x128xf32>
    %387 = arith.addf %384, %386 : vector<8x128xf32>
    %388 = arith.negf %387 : vector<8x128xf32>
    %389 = math.exp %388 : vector<8x128xf32>
    %cst_136 = arith.constant 1.000000e+00 : f32
    %390 = vector.broadcast %cst_136 : f32 to vector<8x128xf32>
    %391 = arith.addf %390, %389 : vector<8x128xf32>
    %392 = arith.divf %390, %391 : vector<8x128xf32>
    %393 = math.tanh %387 : vector<8x128xf32>
    %394 = vector.extract_strided_slice %392 {offsets = [0, 0], sizes = [8, 32], strides = [1, 1]} : vector<8x128xf32> to vector<8x32xf32>
    %395 = vector.extract_strided_slice %392 {offsets = [0, 32], sizes = [8, 32], strides = [1, 1]} : vector<8x128xf32> to vector<8x32xf32>
    %396 = vector.extract_strided_slice %393 {offsets = [0, 64], sizes = [8, 32], strides = [1, 1]} : vector<8x128xf32> to vector<8x32xf32>
    %397 = vector.extract_strided_slice %392 {offsets = [0, 96], sizes = [8, 32], strides = [1, 1]} : vector<8x128xf32> to vector<8x32xf32>
    %398 = arith.mulf %395, %374 : vector<8x32xf32>
    %399 = arith.mulf %394, %396 : vector<8x32xf32>
    %400 = arith.addf %398, %399 : vector<8x32xf32>
    %401 = math.tanh %400 : vector<8x32xf32>
    %402 = arith.mulf %397, %401 : vector<8x32xf32>
    %403 = arith.truncf %402 : vector<8x32xf32> to vector<8x32xbf16>
    %404 = arith.index_cast %c5_i32_132 : i32 to index
    %c0_137 = arith.constant 0 : index
    %c0_138 = arith.constant 0 : index
    %405 = vector.load %arg10[%404, %c0_137, %c0_138] : memref<8x8x32xbf16, #tpu.memory_space<vmem>>, vector<1x8x32xbf16>
    %406 = vector.shape_cast %405 : vector<1x8x32xbf16> to vector<8x32xbf16>
    %407 = vector.shape_cast %403 : vector<8x32xbf16> to vector<1x8x32xbf16>
    tpu.vector_store %arg10[%404, %c0_137, %c0_138], %407 {strides = array<i32>} : memref<8x8x32xbf16, #tpu.memory_space<vmem>>, vector<1x8x32xbf16>,
    %c6_i32_139 = arith.constant 6 : i32
    %408 = arith.index_cast %c6_i32_139 : i32 to index
    %c0_140 = arith.constant 0 : index
    %c0_141 = arith.constant 0 : index
    %409 = vector.load %arg9[%408, %c0_140, %c0_141] : memref<8x8x128xf32, #tpu.memory_space<vmem>>, vector<1x8x128xf32>
    %410 = vector.shape_cast %409 : vector<1x8x128xf32> to vector<8x128xf32>
    %411 = arith.truncf %402 : vector<8x32xf32> to vector<8x32xbf16>
    %cst_142 = arith.constant dense<0.000000e+00> : vector<8x128xf32>
    %412 = tpu.matmul %411, %247, %cst_142 {dimension_numbers = #tpu.dot_dimension_numbers<[1], [0], [0], [1], [0, 0, 1, 1], [], []>} : vector<8x32xbf16>, vector<32x128xbf16>, vector<8x128xf32> -> vector<8x128xf32>
    %413 = arith.addf %410, %412 : vector<8x128xf32>
    %414 = arith.negf %413 : vector<8x128xf32>
    %415 = math.exp %414 : vector<8x128xf32>
    %cst_143 = arith.constant 1.000000e+00 : f32
    %416 = vector.broadcast %cst_143 : f32 to vector<8x128xf32>
    %417 = arith.addf %416, %415 : vector<8x128xf32>
    %418 = arith.divf %416, %417 : vector<8x128xf32>
    %419 = math.tanh %413 : vector<8x128xf32>
    %420 = vector.extract_strided_slice %418 {offsets = [0, 0], sizes = [8, 32], strides = [1, 1]} : vector<8x128xf32> to vector<8x32xf32>
    %421 = vector.extract_strided_slice %418 {offsets = [0, 32], sizes = [8, 32], strides = [1, 1]} : vector<8x128xf32> to vector<8x32xf32>
    %422 = vector.extract_strided_slice %419 {offsets = [0, 64], sizes = [8, 32], strides = [1, 1]} : vector<8x128xf32> to vector<8x32xf32>
    %423 = vector.extract_strided_slice %418 {offsets = [0, 96], sizes = [8, 32], strides = [1, 1]} : vector<8x128xf32> to vector<8x32xf32>
    %424 = arith.mulf %421, %400 : vector<8x32xf32>
    %425 = arith.mulf %420, %422 : vector<8x32xf32>
    %426 = arith.addf %424, %425 : vector<8x32xf32>
    %427 = math.tanh %426 : vector<8x32xf32>
    %428 = arith.mulf %423, %427 : vector<8x32xf32>
    %429 = arith.truncf %428 : vector<8x32xf32> to vector<8x32xbf16>
    %430 = arith.index_cast %c6_i32_139 : i32 to index
    %c0_144 = arith.constant 0 : index
    %c0_145 = arith.constant 0 : index
    %431 = vector.load %arg10[%430, %c0_144, %c0_145] : memref<8x8x32xbf16, #tpu.memory_space<vmem>>, vector<1x8x32xbf16>
    %432 = vector.shape_cast %431 : vector<1x8x32xbf16> to vector<8x32xbf16>
    %433 = vector.shape_cast %429 : vector<8x32xbf16> to vector<1x8x32xbf16>
    tpu.vector_store %arg10[%430, %c0_144, %c0_145], %433 {strides = array<i32>} : memref<8x8x32xbf16, #tpu.memory_space<vmem>>, vector<1x8x32xbf16>,
    %c7_i32_146 = arith.constant 7 : i32
    %434 = arith.index_cast %c7_i32_146 : i32 to index
    %c0_147 = arith.constant 0 : index
    %c0_148 = arith.constant 0 : index
    %435 = vector.load %arg9[%434, %c0_147, %c0_148] : memref<8x8x128xf32, #tpu.memory_space<vmem>>, vector<1x8x128xf32>
    %436 = vector.shape_cast %435 : vector<1x8x128xf32> to vector<8x128xf32>
    %437 = arith.truncf %428 : vector<8x32xf32> to vector<8x32xbf16>
    %cst_149 = arith.constant dense<0.000000e+00> : vector<8x128xf32>
    %438 = tpu.matmul %437, %247, %cst_149 {dimension_numbers = #tpu.dot_dimension_numbers<[1], [0], [0], [1], [0, 0, 1, 1], [], []>} : vector<8x32xbf16>, vector<32x128xbf16>, vector<8x128xf32> -> vector<8x128xf32>
    %439 = arith.addf %436, %438 : vector<8x128xf32>
    %440 = arith.negf %439 : vector<8x128xf32>
    %441 = math.exp %440 : vector<8x128xf32>
    %cst_150 = arith.constant 1.000000e+00 : f32
    %442 = vector.broadcast %cst_150 : f32 to vector<8x128xf32>
    %443 = arith.addf %442, %441 : vector<8x128xf32>
    %444 = arith.divf %442, %443 : vector<8x128xf32>
    %445 = math.tanh %439 : vector<8x128xf32>
    %446 = vector.extract_strided_slice %444 {offsets = [0, 0], sizes = [8, 32], strides = [1, 1]} : vector<8x128xf32> to vector<8x32xf32>
    %447 = vector.extract_strided_slice %444 {offsets = [0, 32], sizes = [8, 32], strides = [1, 1]} : vector<8x128xf32> to vector<8x32xf32>
    %448 = vector.extract_strided_slice %445 {offsets = [0, 64], sizes = [8, 32], strides = [1, 1]} : vector<8x128xf32> to vector<8x32xf32>
    %449 = vector.extract_strided_slice %444 {offsets = [0, 96], sizes = [8, 32], strides = [1, 1]} : vector<8x128xf32> to vector<8x32xf32>
    %450 = arith.mulf %447, %426 : vector<8x32xf32>
    %451 = arith.mulf %446, %448 : vector<8x32xf32>
    %452 = arith.addf %450, %451 : vector<8x32xf32>
    %453 = math.tanh %452 : vector<8x32xf32>
    %454 = arith.mulf %449, %453 : vector<8x32xf32>
    %455 = arith.truncf %454 : vector<8x32xf32> to vector<8x32xbf16>
    %456 = arith.index_cast %c7_i32_146 : i32 to index
    %c0_151 = arith.constant 0 : index
    %c0_152 = arith.constant 0 : index
    %457 = vector.load %arg10[%456, %c0_151, %c0_152] : memref<8x8x32xbf16, #tpu.memory_space<vmem>>, vector<1x8x32xbf16>
    %458 = vector.shape_cast %457 : vector<1x8x32xbf16> to vector<8x32xbf16>
    %459 = vector.shape_cast %455 : vector<8x32xbf16> to vector<1x8x32xbf16>
    tpu.vector_store %arg10[%456, %c0_151, %c0_152], %459 {strides = array<i32>} : memref<8x8x32xbf16, #tpu.memory_space<vmem>>, vector<1x8x32xbf16>,
    %c8_i32_153 = arith.constant 8 : i32
    %c1_154 = arith.constant 1 : index
    %c0_155 = arith.constant 0 : index
    %c0_156 = arith.constant 0 : index
    %460 = vector.load %arg11[%c1_154, %c0_155, %c0_156] : memref<2x8x32xf32, #tpu.memory_space<vmem>>, vector<1x8x32xf32>
    %461 = vector.shape_cast %460 : vector<1x8x32xf32> to vector<8x32xf32>
    %462 = vector.shape_cast %454 : vector<8x32xf32> to vector<1x8x32xf32>
    tpu.vector_store %arg11[%c1_154, %c0_155, %c0_156], %462 {strides = array<i32>} : memref<2x8x32xf32, #tpu.memory_space<vmem>>, vector<1x8x32xf32>,
    %c1_157 = arith.constant 1 : index
    %c0_158 = arith.constant 0 : index
    %c0_159 = arith.constant 0 : index
    %463 = vector.load %arg12[%c1_157, %c0_158, %c0_159] : memref<2x8x32xf32, #tpu.memory_space<vmem>>, vector<1x8x32xf32>
    %464 = vector.shape_cast %463 : vector<1x8x32xf32> to vector<8x32xf32>
    %465 = vector.shape_cast %452 : vector<8x32xf32> to vector<1x8x32xf32>
    tpu.vector_store %arg12[%c1_157, %c0_158, %c0_159], %465 {strides = array<i32>} : memref<2x8x32xf32, #tpu.memory_space<vmem>>, vector<1x8x32xf32>,
    %c0_i32_160 = arith.constant 0 : i32
    %466 = arith.cmpi eq, %arg1, %c0_i32_160 : i32
    %467 = arith.extui %466 : i1 to i32
    %c0_i32_161 = arith.constant 0 : i32
    %468 = arith.cmpi ne, %467, %c0_i32_161 : i32
    scf.if %468 {
      %c1_162 = arith.constant 1 : index
      %c0_163 = arith.constant 0 : index
      %c0_164 = arith.constant 0 : index
      %469 = vector.load %arg11[%c1_162, %c0_163, %c0_164] : memref<2x8x32xf32, #tpu.memory_space<vmem>>, vector<1x8x32xf32>
      %470 = vector.shape_cast %469 : vector<1x8x32xf32> to vector<8x32xf32>
      %c0_165 = arith.constant 0 : index
      %c0_166 = arith.constant 0 : index
      %471 = vector.load %arg6[%c0_165, %c0_166] : memref<1x32xf32, #tpu.memory_space<vmem>>, vector<1x32xf32>
      %472 = vector.broadcast %471 : vector<1x32xf32> to vector<8x32xf32>
      %473 = arith.mulf %470, %472 : vector<8x32xf32>
      %cst_167 = arith.constant dense<0.000000e+00> : vector<8xf32>
      %474 = vector.multi_reduction <add>, %473, %cst_167 [1] : vector<8x32xf32> to vector<8xf32>
      %475 = vector.shape_cast %474 : vector<8xf32> to vector<8x1xf32>
      %c0_168 = arith.constant 0 : index
      %c0_169 = arith.constant 0 : index
      %476 = vector.load %arg7[%c0_168, %c0_169] : memref<1x1xf32, #tpu.memory_space<vmem>>, vector<1x1xf32>
      %477 = vector.broadcast %476 : vector<1x1xf32> to vector<8x1xf32>
      %478 = arith.addf %475, %477 : vector<8x1xf32>
      %c0_170 = arith.constant 0 : index
      %c0_171 = arith.constant 0 : index
      %479 = vector.load %arg8[%c0_170, %c0_171] : memref<8x1xf32, #tpu.memory_space<vmem>>, vector<8x1xf32>
      tpu.vector_store %arg8[%c0_170, %c0_171], %478 {strides = array<i32>} : memref<8x1xf32, #tpu.memory_space<vmem>>, vector<8x1xf32>,
    } else {
    }
    return
  }
  func.func @transform_0(%arg0: i32, %arg1: i32) -> (i32, i32, i32) {
    %c0_i32 = arith.constant 0 : i32
    %c0_i32_0 = arith.constant 0 : i32
    return %arg1, %arg0, %c0_i32 : i32, i32, i32
  }
  func.func @transform_1(%arg0: i32, %arg1: i32) -> (i32, i32, i32) {
    %c0_i32 = arith.constant 0 : i32
    %c0_i32_0 = arith.constant 0 : i32
    %c0_i32_1 = arith.constant 0 : i32
    %c0_i32_2 = arith.constant 0 : i32
    return %c0_i32, %c0_i32_0, %c0_i32_1 : i32, i32, i32
  }
  func.func @transform_2(%arg0: i32, %arg1: i32) -> (i32, i32, i32) {
    %c0_i32 = arith.constant 0 : i32
    %c0_i32_0 = arith.constant 0 : i32
    %c0_i32_1 = arith.constant 0 : i32
    %c0_i32_2 = arith.constant 0 : i32
    return %c0_i32, %c0_i32_0, %c0_i32_1 : i32, i32, i32
  }
  func.func @transform_3(%arg0: i32, %arg1: i32) -> (i32, i32, i32) {
    %c0_i32 = arith.constant 0 : i32
    %c0_i32_0 = arith.constant 0 : i32
    %c0_i32_1 = arith.constant 0 : i32
    %c0_i32_2 = arith.constant 0 : i32
    return %c0_i32, %c0_i32_0, %c0_i32_1 : i32, i32, i32
  }
  func.func @transform_4(%arg0: i32, %arg1: i32) -> (i32, i32) {
    %c0_i32 = arith.constant 0 : i32
    %c0_i32_0 = arith.constant 0 : i32
    %c0_i32_1 = arith.constant 0 : i32
    return %c0_i32, %c0_i32_0 : i32, i32
  }
  func.func @transform_5(%arg0: i32, %arg1: i32) -> (i32, i32) {
    %c0_i32 = arith.constant 0 : i32
    %c0_i32_0 = arith.constant 0 : i32
    %c0_i32_1 = arith.constant 0 : i32
    return %c0_i32, %c0_i32_0 : i32, i32
  }
  func.func @transform_6(%arg0: i32, %arg1: i32) -> (i32, i32) {
    %c0_i32 = arith.constant 0 : i32
    %c0_i32_0 = arith.constant 0 : i32
    return %arg0, %c0_i32 : i32, i32
  }
}

</mosaic_0001>

<llo_original>
// kernel: tpu_custom_call.1
$region0: #{tpu_custom_call.1}
  #allocation0 [shape = 'u32[]', space=smem, size = 0x4, offset = 0x4, fixed_abs, tag = 'smem constant byte address 0x4 - core index']
  #allocation1 [shape = 'u32[72,128]{1,0:T(1,128)}', space=vmem, size = 0x9000, scoped, tag = 'internal scratch']
  #allocation2 [shape = 'f32[8,8,128]{2,1,0:T(8,128)}', space=vmem, size = 0x8000, scoped, tag = 'scratch operand']
  #allocation3 [shape = 'bf16[8,8,32]{2,1,0:T(8,128)(2,1)}', space=vmem, size = 0x4000, scoped, tag = 'scratch operand']
  #allocation4 [shape = 'f32[2,8,32]{2,1,0:T(8,128)}', space=vmem, size = 0x2000, scoped, tag = 'scratch operand']
  #allocation5 [shape = 'f32[2,8,32]{2,1,0:T(8,128)}', space=vmem, size = 0x2000, scoped, tag = 'scratch operand']
  #allocation6 [shape = 'f32[1,1]{1,0:T(1,128)S(1)}', space=vmem, size = 0x200, scoped, tag = 'scoped memory for tpu_custom_call.1']
  %s0 = inlined_call_operand.hbm [shape: bf16[8,8,16], index: 0, kind: input, shape index: {}]
  %s1 = inlined_call_operand.hbm [shape: bf16[2,32,128], index: 1, kind: input, shape index: {}]
  %s2 = inlined_call_operand.hbm [shape: bf16[2,32,128], index: 2, kind: input, shape index: {}]
  %s3 = inlined_call_operand.vmem [shape: f32[2,1,128], index: 3, kind: input, shape index: {}]
  %s4 = inlined_call_operand.vmem [shape: f32[1,32], index: 4, kind: input, shape index: {}]
  %s5 = inlined_call_operand.<no memory space> [shape: f32[1,1], index: 5, kind: input, shape index: {}]
  %s6 = inlined_call_operand.vmem [shape: f32[8,1], index: 6, kind: output, shape index: {}]
  %s7 = sld [smem:[#allocation0]]
  $region54: #{tpu_custom_call.1} parent=0
    _
  %s9 = ssub.s32 1, %s7
  %s10 = scalar_select 0, %s9, %s7
  %v11 = vstv %s5
  %12 = vst [vmem:[#allocation6] sm:$0x1] %v11
  $region1: #{tpu_custom_call.1} parent=0
    #allocation7 [shape = 'u8[16384]{0}', space=vmem, size = 0x4000, scoped, tag = 'input window, operand 0, single buffered']
    #allocation8 [shape = 's32[1]{0}', space=sflag, size = 0x4, scoped, tag = 'scoped memory for tpu_custom_call.1']
    #allocation9 [shape = 'u8[16384]{0}', space=vmem, size = 0x4000, scoped, tag = 'input window, operand 1, single buffered']
    #allocation10 [shape = 's32[1]{0}', space=sflag, size = 0x4, scoped, tag = 'scoped memory for tpu_custom_call.1']
    #allocation11 [shape = 'u8[16384]{0}', space=vmem, size = 0x4000, scoped, tag = 'input window, operand 2, single buffered']
    %13 = vsyncpa [#allocation8], 0
    %14 = vsyncpa [#allocation10], 0
    // Predicated region
    $region2: #{tpu_custom_call.1} parent=1 // pred_check
      _
    $region3: #{tpu_custom_call.1} parent=1 // pred_check_branch
      %16 = sbr.rel (0) target = $region5
    $region4: #{tpu_custom_call.1} parent=1 // pred_region
      %18 = vsyncadd [#allocation8], 0
      %s19 = sshll.u32 %s0, 4
      %s20 = int_to_ptr.hbm [resolvable:$true] %s19
      %s21 = sshll.u32 [#allocation7], 4
      %s22 = int_to_ptr.vmem [resolvable:$true] %s21
      %27 = dma.hbm_to_vmem [thread:$0]  %s20, 512, %s22, [#allocation8], 64, 64, 4
    $region5: #{tpu_custom_call.1} parent=1 // pred_fallthru
      _
    // Predicated region
    $region6: #{tpu_custom_call.1} parent=1 // pred_check
      _
    $region7: #{tpu_custom_call.1} parent=1 // pred_check_branch
      %29 = sbr.rel (0) target = $region9
    $region8: #{tpu_custom_call.1} parent=1 // pred_region
      %31 = vsyncadd [#allocation10], 0
      %s32 = sshll.u32 %s1, 4
      %s33 = int_to_ptr.hbm [resolvable:$true] %s32
      %s34 = sshll.u32 [#allocation9], 4
      %s35 = int_to_ptr.vmem [resolvable:$true] %s34
      %40 = dma.hbm_to_vmem [thread:$0]  %s33, 512, %s35, [#allocation10], 64, 64, 4
    $region9: #{tpu_custom_call.1} parent=1 // pred_fallthru
      _
    // Predicated region
    $region10: #{tpu_custom_call.1} parent=1 // pred_check
      _
    $region11: #{tpu_custom_call.1} parent=1 // pred_check_branch
      %42 = sbr.rel (0) target = $region13
    $region12: #{tpu_custom_call.1} parent=1 // pred_region
      %44 = vsyncadd [#allocation10], 0
      %s45 = sshll.u32 %s2, 4
      %s46 = int_to_ptr.hbm [resolvable:$true] %s45
      %s47 = sshll.u32 [#allocation11], 4
      %s48 = int_to_ptr.vmem [resolvable:$true] %s47
      %53 = dma.hbm_to_vmem [thread:$0]  %s46, 512, %s48, [#allocation10], 64, 64, 4
    $region13: #{tpu_custom_call.1} parent=1 // pred_fallthru
      _
    // Predicated region
    $region14: #{tpu_custom_call.1} parent=1 // pred_check
      _
    $region15: #{tpu_custom_call.1} parent=1 // pred_check_branch
      %55 = sbr.rel (0) target = $region17
    $region16: #{tpu_custom_call.1} parent=1 // pred_region
      _
    $region17: #{tpu_custom_call.1} parent=1 // pred_fallthru
      _
    // Predicated region
    $region18: #{tpu_custom_call.1} parent=1 // pred_check
      _
    $region19: #{tpu_custom_call.1} parent=1 // pred_check_branch
      %57 = sbr.rel (0) target = $region21
    $region20: #{tpu_custom_call.1} parent=1 // pred_region
      _
    $region21: #{tpu_custom_call.1} parent=1 // pred_fallthru
      _
    // Predicated region
    $region22: #{tpu_custom_call.1} parent=1 // pred_check
      _
    $region23: #{tpu_custom_call.1} parent=1 // pred_check_branch
      %59 = sbr.rel (0) target = $region25
    $region24: #{tpu_custom_call.1} parent=1 // pred_region
      _
    $region25: #{tpu_custom_call.1} parent=1 // pred_fallthru
      _
    // Predicated region
    $region26: #{tpu_custom_call.1} parent=1 // pred_check
      _
    $region27: #{tpu_custom_call.1} parent=1 // pred_check_branch
      %61 = sbr.rel (0) target = $region29
    $region28: #{tpu_custom_call.1} parent=1 // pred_region
      %63 = dma.done [#allocation8], 512
    $region29: #{tpu_custom_call.1} parent=1 // pred_fallthru
      _
    // Predicated region
    $region30: #{tpu_custom_call.1} parent=1 // pred_check
      _
    $region31: #{tpu_custom_call.1} parent=1 // pred_check_branch
      %65 = sbr.rel (0) target = $region33
    $region32: #{tpu_custom_call.1} parent=1 // pred_region
      %67 = dma.done [#allocation10], 512
    $region33: #{tpu_custom_call.1} parent=1 // pred_fallthru
      _
    // Predicated region
    $region34: #{tpu_custom_call.1} parent=1 // pred_check
      _
    $region35: #{tpu_custom_call.1} parent=1 // pred_check_branch
      %69 = sbr.rel (0) target = $region37
    $region36: #{tpu_custom_call.1} parent=1 // pred_region
      %71 = dma.done [#allocation10], 512
    $region37: #{tpu_custom_call.1} parent=1 // pred_fallthru
      _
    %p73 = scmp.eq.s32.totalorder 0, 0
    // Predicated region
    $region38: #{tpu_custom_call.1} parent=1 // pred_check
      %p74 = pneg %p73
    $region39: #{tpu_custom_call.1} parent=1 // pred_check_branch
      %76 = sbr.rel (%p74) target = $region41
    $region40: #{tpu_custom_call.1} parent=1 // pred_region
      %vm77 = vcmask 261120
      %78 = vst.msk [vmem:[#allocation4] sm:$0xff] %vm77, 0.0
      %79 = vst.msk [vmem:[#allocation4 + $0x8] sm:$0xff] %vm77, 0.0
      %80 = vst.msk [vmem:[#allocation5] sm:$0xff] %vm77, 0.0
      %81 = vst.msk [vmem:[#allocation5 + $0x8] sm:$0xff] %vm77, 0.0
    $region41: #{tpu_custom_call.1} parent=1 // pred_fallthru
      _
    %v82 = vld [vmem:[#allocation7] sm:$0xf]
    %v83 = vld [vmem:[#allocation7 + $0x4] sm:$0xf]
    %v84 = vld [vmem:[#allocation7 + $0x8] sm:$0xf]
    %v85 = vld [vmem:[#allocation7 + $0xc] sm:$0xf]
    %v86 = vld [vmem:[#allocation7 + $0x10] sm:$0xf]
    %v87 = vld [vmem:[#allocation7 + $0x14] sm:$0xf]
    %v88 = vld [vmem:[#allocation7 + $0x18] sm:$0xf]
    %v89 = vld [vmem:[#allocation7 + $0x1c] sm:$0xf]
    %v90 = vld [vmem:[#allocation9] sm:$0xf]
    %v91 = vld [vmem:[#allocation9 + $0x4] sm:$0xf]
    %v92 = vld [vmem:[%s3] sm:$0x1]
    %v94 = vperm.slane %v92, 0
    %v104 = vunpack.c.l.b16 %v82
    %v105 = vunpack.c.l.b16 %v83
    %v106 = vunpack.c.l.b16 %v84
    %v107 = vunpack.c.l.b16 %v85
    %v108 = vunpack.c.l.b16 %v86
    %v109 = vunpack.c.l.b16 %v87
    %v110 = vunpack.c.l.b16 %v88
    %v111 = vunpack.c.l.b16 %v89
    %v112 = vpack.c.b16 %v105, %v104
    %v113 = vpack.c.b16 %v107, %v106
    %v114 = vpack.c.b16 %v109, %v108
    %v115 = vpack.c.b16 %v111, %v110
    %v118 = vunpack.c.l.b16 %v90
    %v119 = vunpack.c.l.b16 %v91
    %v120 = vpack.c.b16 %v119, %v118
    %vm122 = vcmask 130048
    %v124 = vsel %vm122, %v112, 0
    %v127 = vsel %vm122, %v113, 0
    %v130 = vsel %vm122, %v114, 0
    %v133 = vsel %vm122, %v115, 0
    %135 = vmatpush.bf16.msra.mxu0 0
    %136 = vmatpush.bf16.msra.mxu0 0
    %137 = vmatpush.bf16.msra.mxu0 0
    %138 = vmatpush.bf16.msra.mxu0 0
    %139 = vmatpush.bf16.msra.mxu0 0
    %140 = vmatpush.bf16.msra.mxu0 0
    %141 = vmatpush.bf16.msra.mxu0 0
    %142 = vmatpush.bf16.msra.mxu0 %v120
    %143 = vmatmul.bf16.gmra.mxu0 %v124
    %v144 = vpop.f32.mrf.mxu0
    %v145 = vadd.f32 %v94, %v144
    %v146 = vpop.f32.mrf.mxu0
    %v147 = vadd.f32 %v94, %v146
    %148 = vmatmul.bf16.gmra.mxu0 %v127
    %v149 = vpop.f32.mrf.mxu0
    %v150 = vadd.f32 %v94, %v149
    %v151 = vpop.f32.mrf.mxu0
    %v152 = vadd.f32 %v94, %v151
    %153 = vmatmul.bf16.gmra.mxu0 %v130
    %v154 = vpop.f32.mrf.mxu0
    %v155 = vadd.f32 %v94, %v154
    %v156 = vpop.f32.mrf.mxu0
    %v157 = vadd.f32 %v94, %v156
    %158 = vmatmul.bf16.gmra.mxu0 %v133
    %v159 = vpop.f32.mrf.mxu0
    %v160 = vadd.f32 %v94, %v159
    %v161 = vpop.f32.mrf.mxu0
    %v162 = vadd.f32 %v94, %v161
    %163 = vdwg.mxu0
    %164 = vst [vmem:[#allocation2] sm:$0xff] %v145
    %165 = vst [vmem:[#allocation2 + $0x8] sm:$0xff] %v147
    %166 = vst [vmem:[#allocation2 + $0x10] sm:$0xff] %v150
    %167 = vst [vmem:[#allocation2 + $0x18] sm:$0xff] %v152
    %168 = vst [vmem:[#allocation2 + $0x20] sm:$0xff] %v155
    %169 = vst [vmem:[#allocation2 + $0x28] sm:$0xff] %v157
    %170 = vst [vmem:[#allocation2 + $0x30] sm:$0xff] %v160
    %171 = vst [vmem:[#allocation2 + $0x38] sm:$0xff] %v162
    %v172 = vld [vmem:[#allocation11] sm:$0xf]
    %v173 = vld [vmem:[#allocation11 + $0x4] sm:$0xf]
    %v174 = vld [vmem:[#allocation11 + $0x8] sm:$0xf]
    %v175 = vld [vmem:[#allocation11 + $0xc] sm:$0xf]
    %v176 = vld [vmem:[#allocation4] sm:$0xff]
    %v177 = vld [vmem:[#allocation5] sm:$0xff]
    %v178 = vld [vmem:[#allocation2] sm:$0xff]
    %v179 = vpack.c.bf16 %v176, %v176
    %v184 = vunpack.c.l.b16 %v172
    %v185 = vunpack.c.l.b16 %v173
    %v186 = vunpack.c.l.b16 %v174
    %v187 = vunpack.c.l.b16 %v175
    %v188 = vpack.c.b16 %v185, %v184
    %v189 = vpack.c.b16 %v187, %v186
    %vm192 = vcmask 261120
    %v194 = vsel %vm192, %v179, 0
    %196 = vmatpush.bf16.msra.mxu0 0
    %197 = vmatpush.bf16.msra.mxu0 0
    %198 = vmatpush.bf16.msra.mxu0 0
    %199 = vmatpush.bf16.msra.mxu0 0
    %200 = vmatpush.bf16.msra.mxu0 0
    %201 = vmatpush.bf16.msra.mxu0 0
    %202 = vmatpush.bf16.msra.mxu0 %v189
    %203 = vmatpush.bf16.msra.mxu0 %v188
    %204 = vmatmul.bf16.gmra.mxu0 %v194
    %v205 = vpop.f32.mrf.mxu0
    %v206 = vadd.f32 0.0, %v205
    %v207 = vpop.f32.mrf.mxu0
    %208 = vdwg.mxu0
    %v209 = vadd.f32 %v178, %v206
    %v210 = vxor.u32 %v209, 2147483648
    %v211 = vmul.f32 %v210, 1.442695
    %v212 = vpow.pop %v211
    %v213 = vadd.f32 %v212, 1.0
    %v214 = vrcp.pop %v213
    %v215 = vmul.f32 %v213, %v214
    %v216 = vsub.f32 1.0, %v215
    %v217 = vmul.f32 %v214, %v216
    %v218 = vadd.f32 %v214, %v217
    %vm219 = vweird.f32 %v213
    %vm220 = vweird.f32 %v214
    %vm221 = vmor %vm219, %vm220
    %v222 = vsel %vm221, %v214, %v218
    %v223 = vand.u32 2147483647, %v213
    %vm224 = vcmp.eq.f32.partialorder %v223, 8.507059e+37
    %v225 = vand.u32 %v213, 2147483648
    %v226 = vor.u32 1.1754944e-38, %v225
    %v227 = vsel %vm224, %v226, %v222
    %v228 = vmul.f32 1.0, %v227
    %v229 = vtanh.pop %v209
    %231 = vrot.lane.b32.xlu0 %v177, 32
    %v232 = vpop.permute.xlu0 %231
    %v234 = vmul.f32 %v228, %v232
    %236 = vrot.lane.b32.xlu0 %v229, 64
    %v237 = vpop.permute.xlu0 %236
    %v239 = vmul.f32 %v228, %v237
    %241 = vrot.lane.b32.xlu0 %v239, 32
    %v242 = vpop.permute.xlu0 %241
    %v244 = vadd.f32 %v234, %v242
    %v245 = vtanh.pop %v244
    %247 = vrot.lane.b32.xlu0 %v245, 64
    %v248 = vpop.permute.xlu0 %247
    %v250 = vmul.f32 %v228, %v248
    %v251 = vpack.c.bf16 %v250, %v250
    %253 = vrot.lane.b32.xlu0 %v251, 32
    %v254 = vpop.permute.xlu0 %253
    %vm256 = vcmask 257024
    %257 = vst.msk [vmem:[#allocation3] sm:$0xf] %vm256, %v254
    %s258 = scalar_lea.vmem [#allocation2], 8
    %v259 = vld [vmem:[%s258] sm:$0xff]
    %v260 = vunpack.c.l.b16 %v251
    %v261 = vpack.c.b16 %v260, %v260
    %262 = vrot.lane.b32.xlu0 %v261, 32
    %v263 = vpop.permute.xlu0 %262
    %v265 = vsel %vm192, %v263, 0
    %267 = vmatpush.bf16.msra.mxu0 0
    %268 = vmatpush.bf16.msra.mxu0 0
    %269 = vmatpush.bf16.msra.mxu0 0
    %270 = vmatpush.bf16.msra.mxu0 0
    %271 = vmatpush.bf16.msra.mxu0 0
    %272 = vmatpush.bf16.msra.mxu0 0
    %273 = vmatpush.bf16.msra.mxu0 %v189
    %274 = vmatpush.bf16.msra.mxu0 %v188
    %275 = vmatmul.bf16.gmra.mxu0 %v265
    %v276 = vpop.f32.mrf.mxu0
    %v277 = vadd.f32 0.0, %v276
    %v278 = vpop.f32.mrf.mxu0
    %279 = vdwg.mxu0
    %v280 = vadd.f32 %v259, %v277
    %v281 = vxor.u32 %v280, 2147483648
    %v282 = vmul.f32 %v281, 1.442695
    %v283 = vpow.pop %v282
    %v284 = vadd.f32 %v283, 1.0
    %v285 = vrcp.pop %v284
    %v286 = vmul.f32 %v284, %v285
    %v287 = vsub.f32 1.0, %v286
    %v288 = vmul.f32 %v285, %v287
    %v289 = vadd.f32 %v285, %v288
    %vm290 = vweird.f32 %v284
    %vm291 = vweird.f32 %v285
    %vm292 = vmor %vm290, %vm291
    %v293 = vsel %vm292, %v285, %v289
    %v294 = vand.u32 2147483647, %v284
    %vm295 = vcmp.eq.f32.partialorder %v294, 8.507059e+37
    %v296 = vand.u32 %v284, 2147483648
    %v297 = vor.u32 1.1754944e-38, %v296
    %v298 = vsel %vm295, %v297, %v293
    %v299 = vmul.f32 1.0, %v298
    %v300 = vtanh.pop %v280
    %v301 = vmul.f32 %v299, %v244
    %303 = vrot.lane.b32.xlu0 %v300, 64
    %v304 = vpop.permute.xlu0 %303
    %v306 = vmul.f32 %v299, %v304
    %308 = vrot.lane.b32.xlu0 %v306, 32
    %v309 = vpop.permute.xlu0 %308
    %v311 = vadd.f32 %v301, %v309
    %v312 = vtanh.pop %v311
    %314 = vrot.lane.b32.xlu0 %v312, 64
    %v315 = vpop.permute.xlu0 %314
    %v317 = vmul.f32 %v299, %v315
    %v318 = vpack.c.bf16 %v317, %v317
    %320 = vrot.lane.b32.xlu0 %v318, 32
    %v321 = vpop.permute.xlu0 %320
    %s323 = scalar_lea.vmem [#allocation3], 4
    %324 = vst.msk [vmem:[%s323] sm:$0xf] %vm256, %v321
    %s325 = scalar_lea.vmem [#allocation2], 16
    %v326 = vld [vmem:[%s325] sm:$0xff]
    %v327 = vunpack.c.l.b16 %v318
    %v328 = vpack.c.b16 %v327, %v327
    %329 = vrot.lane.b32.xlu0 %v328, 32
    %v330 = vpop.permute.xlu0 %329
    %v332 = vsel %vm192, %v330, 0
    %334 = vmatpush.bf16.msra.mxu0 0
    %335 = vmatpush.bf16.msra.mxu0 0
    %336 = vmatpush.bf16.msra.mxu0 0
    %337 = vmatpush.bf16.msra.mxu0 0
    %338 = vmatpush.bf16.msra.mxu0 0
    %339 = vmatpush.bf16.msra.mxu0 0
    %340 = vmatpush.bf16.msra.mxu0 %v189
    %341 = vmatpush.bf16.msra.mxu0 %v188
    %342 = vmatmul.bf16.gmra.mxu0 %v332
    %v343 = vpop.f32.mrf.mxu0
    %v344 = vadd.f32 0.0, %v343
    %v345 = vpop.f32.mrf.mxu0
    %346 = vdwg.mxu0
    %v347 = vadd.f32 %v326, %v344
    %v348 = vxor.u32 %v347, 2147483648
    %v349 = vmul.f32 %v348, 1.442695
    %v350 = vpow.pop %v349
    %v351 = vadd.f32 %v350, 1.0
    %v352 = vrcp.pop %v351
    %v353 = vmul.f32 %v351, %v352
    %v354 = vsub.f32 1.0, %v353
    %v355 = vmul.f32 %v352, %v354
    %v356 = vadd.f32 %v352, %v355
    %vm357 = vweird.f32 %v351
    %vm358 = vweird.f32 %v352
    %vm359 = vmor %vm357, %vm358
    %v360 = vsel %vm359, %v352, %v356
    %v361 = vand.u32 2147483647, %v351
    %vm362 = vcmp.eq.f32.partialorder %v361, 8.507059e+37
    %v363 = vand.u32 %v351, 2147483648
    %v364 = vor.u32 1.1754944e-38, %v363
    %v365 = vsel %vm362, %v364, %v360
    %v366 = vmul.f32 1.0, %v365
    %v367 = vtanh.pop %v347
    %v368 = vmul.f32 %v366, %v311
    %370 = vrot.lane.b32.xlu0 %v367, 64
    %v371 = vpop.permute.xlu0 %370
    %v373 = vmul.f32 %v366, %v371
    %375 = vrot.lane.b32.xlu0 %v373, 32
    %v376 = vpop.permute.xlu0 %375
    %v378 = vadd.f32 %v368, %v376
    %v379 = vtanh.pop %v378
    %381 = vrot.lane.b32.xlu0 %v379, 64
    %v382 = vpop.permute.xlu0 %381
    %v384 = vmul.f32 %v366, %v382
    %v385 = vpack.c.bf16 %v384, %v384
    %387 = vrot.lane.b32.xlu0 %v385, 32
    %v388 = vpop.permute.xlu0 %387
    %s390 = scalar_lea.vmem [#allocation3], 8
    %391 = vst.msk [vmem:[%s390] sm:$0xf] %vm256, %v388
    %s392 = scalar_lea.vmem [#allocation2], 24
    %v393 = vld [vmem:[%s392] sm:$0xff]
    %v394 = vunpack.c.l.b16 %v385
    %v395 = vpack.c.b16 %v394, %v394
    %396 = vrot.lane.b32.xlu0 %v395, 32
    %v397 = vpop.permute.xlu0 %396
    %v399 = vsel %vm192, %v397, 0
    %401 = vmatpush.bf16.msra.mxu0 0
    %402 = vmatpush.bf16.msra.mxu0 0
    %403 = vmatpush.bf16.msra.mxu0 0
    %404 = vmatpush.bf16.msra.mxu0 0
    %405 = vmatpush.bf16.msra.mxu0 0
    %406 = vmatpush.bf16.msra.mxu0 0
    %407 = vmatpush.bf16.msra.mxu0 %v189
    %408 = vmatpush.bf16.msra.mxu0 %v188
    %409 = vmatmul.bf16.gmra.mxu0 %v399
    %v410 = vpop.f32.mrf.mxu0
    %v411 = vadd.f32 0.0, %v410
    %v412 = vpop.f32.mrf.mxu0
    %413 = vdwg.mxu0
    %v414 = vadd.f32 %v393, %v411
    %v415 = vxor.u32 %v414, 2147483648
    %v416 = vmul.f32 %v415, 1.442695
    %v417 = vpow.pop %v416
    %v418 = vadd.f32 %v417, 1.0
    %v419 = vrcp.pop %v418
    %v420 = vmul.f32 %v418, %v419
    %v421 = vsub.f32 1.0, %v420
    %v422 = vmul.f32 %v419, %v421
    %v423 = vadd.f32 %v419, %v422
    %vm424 = vweird.f32 %v418
    %vm425 = vweird.f32 %v419
    %vm426 = vmor %vm424, %vm425
    %v427 = vsel %vm426, %v419, %v423
    %v428 = vand.u32 2147483647, %v418
    %vm429 = vcmp.eq.f32.partialorder %v428, 8.507059e+37
    %v430 = vand.u32 %v418, 2147483648
    %v431 = vor.u32 1.1754944e-38, %v430
    %v432 = vsel %vm429, %v431, %v427
    %v433 = vmul.f32 1.0, %v432
    %v434 = vtanh.pop %v414
    %v435 = vmul.f32 %v433, %v378
    %437 = vrot.lane.b32.xlu0 %v434, 64
    %v438 = vpop.permute.xlu0 %437
    %v440 = vmul.f32 %v433, %v438
    %442 = vrot.lane.b32.xlu0 %v440, 32
    %v443 = vpop.permute.xlu0 %442
    %v445 = vadd.f32 %v435, %v443
    %v446 = vtanh.pop %v445
    %448 = vrot.lane.b32.xlu0 %v446, 64
    %v449 = vpop.permute.xlu0 %448
    %v451 = vmul.f32 %v433, %v449
    %v452 = vpack.c.bf16 %v451, %v451
    %454 = vrot.lane.b32.xlu0 %v452, 32
    %v455 = vpop.permute.xlu0 %454
    %s457 = scalar_lea.vmem [#allocation3], 12
    %458 = vst.msk [vmem:[%s457] sm:$0xf] %vm256, %v455
    %s459 = scalar_lea.vmem [#allocation2], 32
    %v460 = vld [vmem:[%s459] sm:$0xff]
    %v461 = vunpack.c.l.b16 %v452
    %v462 = vpack.c.b16 %v461, %v461
    %463 = vrot.lane.b32.xlu0 %v462, 32
    %v464 = vpop.permute.xlu0 %463
    %v466 = vsel %vm192, %v464, 0
    %468 = vmatpush.bf16.msra.mxu0 0
    %469 = vmatpush.bf16.msra.mxu0 0
    %470 = vmatpush.bf16.msra.mxu0 0
    %471 = vmatpush.bf16.msra.mxu0 0
    %472 = vmatpush.bf16.msra.mxu0 0
    %473 = vmatpush.bf16.msra.mxu0 0
    %474 = vmatpush.bf16.msra.mxu0 %v189
    %475 = vmatpush.bf16.msra.mxu0 %v188
    %476 = vmatmul.bf16.gmra.mxu0 %v466
    %v477 = vpop.f32.mrf.mxu0
    %v478 = vadd.f32 0.0, %v477
    %v479 = vpop.f32.mrf.mxu0
    %480 = vdwg.mxu0
    %v481 = vadd.f32 %v460, %v478
    %v482 = vxor.u32 %v481, 2147483648
    %v483 = vmul.f32 %v482, 1.442695
    %v484 = vpow.pop %v483
    %v485 = vadd.f32 %v484, 1.0
    %v486 = vrcp.pop %v485
    %v487 = vmul.f32 %v485, %v486
    %v488 = vsub.f32 1.0, %v487
    %v489 = vmul.f32 %v486, %v488
    %v490 = vadd.f32 %v486, %v489
    %vm491 = vweird.f32 %v485
    %vm492 = vweird.f32 %v486
    %vm493 = vmor %vm491, %vm492
    %v494 = vsel %vm493, %v486, %v490
    %v495 = vand.u32 2147483647, %v485
    %vm496 = vcmp.eq.f32.partialorder %v495, 8.507059e+37
    %v497 = vand.u32 %v485, 2147483648
    %v498 = vor.u32 1.1754944e-38, %v497
    %v499 = vsel %vm496, %v498, %v494
    %v500 = vmul.f32 1.0, %v499
    %v501 = vtanh.pop %v481
    %v502 = vmul.f32 %v500, %v445
    %504 = vrot.lane.b32.xlu0 %v501, 64
    %v505 = vpop.permute.xlu0 %504
    %v507 = vmul.f32 %v500, %v505
    %509 = vrot.lane.b32.xlu0 %v507, 32
    %v510 = vpop.permute.xlu0 %509
    %v512 = vadd.f32 %v502, %v510
    %v513 = vtanh.pop %v512
    %515 = vrot.lane.b32.xlu0 %v513, 64
    %v516 = vpop.permute.xlu0 %515
    %v518 = vmul.f32 %v500, %v516
    %v519 = vpack.c.bf16 %v518, %v518
    %521 = vrot.lane.b32.xlu0 %v519, 32
    %v522 = vpop.permute.xlu0 %521
    %s524 = scalar_lea.vmem [#allocation3], 16
    %525 = vst.msk [vmem:[%s524] sm:$0xf] %vm256, %v522
    %s526 = scalar_lea.vmem [#allocation2], 40
    %v527 = vld [vmem:[%s526] sm:$0xff]
    %v528 = vunpack.c.l.b16 %v519
    %v529 = vpack.c.b16 %v528, %v528
    %530 = vrot.lane.b32.xlu0 %v529, 32
    %v531 = vpop.permute.xlu0 %530
    %v533 = vsel %vm192, %v531, 0
    %535 = vmatpush.bf16.msra.mxu0 0
    %536 = vmatpush.bf16.msra.mxu0 0
    %537 = vmatpush.bf16.msra.mxu0 0
    %538 = vmatpush.bf16.msra.mxu0 0
    %539 = vmatpush.bf16.msra.mxu0 0
    %540 = vmatpush.bf16.msra.mxu0 0
    %541 = vmatpush.bf16.msra.mxu0 %v189
    %542 = vmatpush.bf16.msra.mxu0 %v188
    %543 = vmatmul.bf16.gmra.mxu0 %v533
    %v544 = vpop.f32.mrf.mxu0
    %v545 = vadd.f32 0.0, %v544
    %v546 = vpop.f32.mrf.mxu0
    %547 = vdwg.mxu0
    %v548 = vadd.f32 %v527, %v545
    %v549 = vxor.u32 %v548, 2147483648
    %v550 = vmul.f32 %v549, 1.442695
    %v551 = vpow.pop %v550
    %v552 = vadd.f32 %v551, 1.0
    %v553 = vrcp.pop %v552
    %v554 = vmul.f32 %v552, %v553
    %v555 = vsub.f32 1.0, %v554
    %v556 = vmul.f32 %v553, %v555
    %v557 = vadd.f32 %v553, %v556
    %vm558 = vweird.f32 %v552
    %vm559 = vweird.f32 %v553
    %vm560 = vmor %vm558, %vm559
    %v561 = vsel %vm560, %v553, %v557
    %v562 = vand.u32 2147483647, %v552
    %vm563 = vcmp.eq.f32.partialorder %v562, 8.507059e+37
    %v564 = vand.u32 %v552, 2147483648
    %v565 = vor.u32 1.1754944e-38, %v564
    %v566 = vsel %vm563, %v565, %v561
    %v567 = vmul.f32 1.0, %v566
    %v568 = vtanh.pop %v548
    %v569 = vmul.f32 %v567, %v512
    %571 = vrot.lane.b32.xlu0 %v568, 64
    %v572 = vpop.permute.xlu0 %571
    %v574 = vmul.f32 %v567, %v572
    %576 = vrot.lane.b32.xlu0 %v574, 32
    %v577 = vpop.permute.xlu0 %576
    %v579 = vadd.f32 %v569, %v577
    %v580 = vtanh.pop %v579
    %582 = vrot.lane.b32.xlu0 %v580, 64
    %v583 = vpop.permute.xlu0 %582
    %v585 = vmul.f32 %v567, %v583
    %v586 = vpack.c.bf16 %v585, %v585
    %588 = vrot.lane.b32.xlu0 %v586, 32
    %v589 = vpop.permute.xlu0 %588
    %s591 = scalar_lea.vmem [#allocation3], 20
    %592 = vst.msk [vmem:[%s591] sm:$0xf] %vm256, %v589
    %s593 = scalar_lea.vmem [#allocation2], 48
    %v594 = vld [vmem:[%s593] sm:$0xff]
    %v595 = vunpack.c.l.b16 %v586
    %v596 = vpack.c.b16 %v595, %v595
    %597 = vrot.lane.b32.xlu0 %v596, 32
    %v598 = vpop.permute.xlu0 %597
    %v600 = vsel %vm192, %v598, 0
    %602 = vmatpush.bf16.msra.mxu0 0
    %603 = vmatpush.bf16.msra.mxu0 0
    %604 = vmatpush.bf16.msra.mxu0 0
    %605 = vmatpush.bf16.msra.mxu0 0
    %606 = vmatpush.bf16.msra.mxu0 0
    %607 = vmatpush.bf16.msra.mxu0 0
    %608 = vmatpush.bf16.msra.mxu0 %v189
    %609 = vmatpush.bf16.msra.mxu0 %v188
    %610 = vmatmul.bf16.gmra.mxu0 %v600
    %v611 = vpop.f32.mrf.mxu0
    %v612 = vadd.f32 0.0, %v611
    %v613 = vpop.f32.mrf.mxu0
    %614 = vdwg.mxu0
    %v615 = vadd.f32 %v594, %v612
    %v616 = vxor.u32 %v615, 2147483648
    %v617 = vmul.f32 %v616, 1.442695
    %v618 = vpow.pop %v617
    %v619 = vadd.f32 %v618, 1.0
    %v620 = vrcp.pop %v619
    %v621 = vmul.f32 %v619, %v620
    %v622 = vsub.f32 1.0, %v621
    %v623 = vmul.f32 %v620, %v622
    %v624 = vadd.f32 %v620, %v623
    %vm625 = vweird.f32 %v619
    %vm626 = vweird.f32 %v620
    %vm627 = vmor %vm625, %vm626
    %v628 = vsel %vm627, %v620, %v624
    %v629 = vand.u32 2147483647, %v619
    %vm630 = vcmp.eq.f32.partialorder %v629, 8.507059e+37
    %v631 = vand.u32 %v619, 2147483648
    %v632 = vor.u32 1.1754944e-38, %v631
    %v633 = vsel %vm630, %v632, %v628
    %v634 = vmul.f32 1.0, %v633
    %v635 = vtanh.pop %v615
    %v636 = vmul.f32 %v634, %v579
    %638 = vrot.lane.b32.xlu0 %v635, 64
    %v639 = vpop.permute.xlu0 %638
    %v641 = vmul.f32 %v634, %v639
    %643 = vrot.lane.b32.xlu0 %v641, 32
    %v644 = vpop.permute.xlu0 %643
    %v646 = vadd.f32 %v636, %v644
    %v647 = vtanh.pop %v646
    %649 = vrot.lane.b32.xlu0 %v647, 64
    %v650 = vpop.permute.xlu0 %649
    %v652 = vmul.f32 %v634, %v650
    %v653 = vpack.c.bf16 %v652, %v652
    %655 = vrot.lane.b32.xlu0 %v653, 32
    %v656 = vpop.permute.xlu0 %655
    %s658 = scalar_lea.vmem [#allocation3], 24
    %659 = vst.msk [vmem:[%s658] sm:$0xf] %vm256, %v656
    %s660 = scalar_lea.vmem [#allocation2], 56
    %v661 = vld [vmem:[%s660] sm:$0xff]
    %v662 = vunpack.c.l.b16 %v653
    %v663 = vpack.c.b16 %v662, %v662
    %664 = vrot.lane.b32.xlu0 %v663, 32
    %v665 = vpop.permute.xlu0 %664
    %v667 = vsel %vm192, %v665, 0
    %669 = vmatpush.bf16.msra.mxu0 0
    %670 = vmatpush.bf16.msra.mxu0 0
    %671 = vmatpush.bf16.msra.mxu0 0
    %672 = vmatpush.bf16.msra.mxu0 0
    %673 = vmatpush.bf16.msra.mxu0 0
    %674 = vmatpush.bf16.msra.mxu0 0
    %675 = vmatpush.bf16.msra.mxu0 %v189
    %676 = vmatpush.bf16.msra.mxu0 %v188
    %677 = vmatmul.bf16.gmra.mxu0 %v667
    %v678 = vpop.f32.mrf.mxu0
    %v679 = vadd.f32 0.0, %v678
    %v680 = vpop.f32.mrf.mxu0
    %681 = vdwg.mxu0
    %v682 = vadd.f32 %v661, %v679
    %v683 = vxor.u32 %v682, 2147483648
    %v684 = vmul.f32 %v683, 1.442695
    %v685 = vpow.pop %v684
    %v686 = vadd.f32 %v685, 1.0
    %v687 = vrcp.pop %v686
    %v688 = vmul.f32 %v686, %v687
    %v689 = vsub.f32 1.0, %v688
    %v690 = vmul.f32 %v687, %v689
    %v691 = vadd.f32 %v687, %v690
    %vm692 = vweird.f32 %v686
    %vm693 = vweird.f32 %v687
    %vm694 = vmor %vm692, %vm693
    %v695 = vsel %vm694, %v687, %v691
    %v696 = vand.u32 2147483647, %v686
    %vm697 = vcmp.eq.f32.partialorder %v696, 8.507059e+37
    %v698 = vand.u32 %v686, 2147483648
    %v699 = vor.u32 1.1754944e-38, %v698
    %v700 = vsel %vm697, %v699, %v695
    %v701 = vmul.f32 1.0, %v700
    %v702 = vtanh.pop %v682
    %v703 = vmul.f32 %v701, %v646
    %705 = vrot.lane.b32.xlu0 %v702, 64
    %v706 = vpop.permute.xlu0 %705
    %v708 = vmul.f32 %v701, %v706
    %710 = vrot.lane.b32.xlu0 %v708, 32
    %v711 = vpop.permute.xlu0 %710
    %v713 = vadd.f32 %v703, %v711
    %v714 = vtanh.pop %v713
    %716 = vrot.lane.b32.xlu0 %v714, 64
    %v717 = vpop.permute.xlu0 %716
    %v719 = vmul.f32 %v701, %v717
    %v720 = vpack.c.bf16 %v719, %v719
    %722 = vrot.lane.b32.xlu0 %v720, 32
    %v723 = vpop.permute.xlu0 %722
    %s725 = scalar_lea.vmem [#allocation3], 28
    %726 = vst.msk [vmem:[%s725] sm:$0xf] %vm256, %v723
    %728 = vrot.lane.b32.xlu0 %v719, 32
    %v729 = vpop.permute.xlu0 %728
    %731 = vst.msk [vmem:[#allocation4] sm:$0xff] %vm192, %v729
    %733 = vrot.lane.b32.xlu0 %v713, 96
    %v734 = vpop.permute.xlu0 %733
    %736 = vst.msk [vmem:[#allocation5] sm:$0xff] %vm192, %v734
    %v737 = vld [vmem:[#allocation3] sm:$0xf]
    %v738 = vld [vmem:[#allocation3 + $0x4] sm:$0xf]
    %v739 = vld [vmem:[#allocation3 + $0x8] sm:$0xf]
    %v740 = vld [vmem:[#allocation3 + $0xc] sm:$0xf]
    %v741 = vld [vmem:[#allocation3 + $0x10] sm:$0xf]
    %v742 = vld [vmem:[#allocation3 + $0x14] sm:$0xf]
    %v743 = vld [vmem:[#allocation3 + $0x18] sm:$0xf]
    %v744 = vld [vmem:[#allocation3 + $0x1c] sm:$0xf]
    %s745 = scalar_lea.vmem [#allocation9], 16
    %v746 = vld [vmem:[%s745] sm:$0xf]
    %v747 = vld [vmem:[%s745 + $0x4] sm:$0xf]
    %v748 = vld [vmem:[%s745 + $0x8] sm:$0xf]
    %v749 = vld [vmem:[%s745 + $0xc] sm:$0xf]
    %s750 = scalar_lea.vmem %s3, 1
    %v751 = vld [vmem:[%s750] sm:$0x1]
    %v753 = vperm.slane %v751, 0
    %v763 = vunpack.c.l.b16 %v737
    %v764 = vunpack.c.l.b16 %v738
    %v765 = vunpack.c.l.b16 %v739
    %v766 = vunpack.c.l.b16 %v740
    %v767 = vunpack.c.l.b16 %v741
    %v768 = vunpack.c.l.b16 %v742
    %v769 = vunpack.c.l.b16 %v743
    %v770 = vunpack.c.l.b16 %v744
    %v771 = vpack.c.b16 %v764, %v763
    %v772 = vpack.c.b16 %v766, %v765
    %v773 = vpack.c.b16 %v768, %v767
    %v774 = vpack.c.b16 %v770, %v769
    %v779 = vunpack.c.l.b16 %v746
    %v780 = vunpack.c.l.b16 %v747
    %v781 = vunpack.c.l.b16 %v748
    %v782 = vunpack.c.l.b16 %v749
    %v783 = vpack.c.b16 %v780, %v779
    %v784 = vpack.c.b16 %v782, %v781
    %v788 = vsel %vm192, %v771, 0
    %v791 = vsel %vm192, %v772, 0
    %v794 = vsel %vm192, %v773, 0
    %v797 = vsel %vm192, %v774, 0
    %799 = vmatpush.bf16.msra.mxu0 0
    %800 = vmatpush.bf16.msra.mxu0 0
    %801 = vmatpush.bf16.msra.mxu0 0
    %802 = vmatpush.bf16.msra.mxu0 0
    %803 = vmatpush.bf16.msra.mxu0 0
    %804 = vmatpush.bf16.msra.mxu0 0
    %805 = vmatpush.bf16.msra.mxu0 %v784
    %806 = vmatpush.bf16.msra.mxu0 %v783
    %807 = vmatmul.bf16.gmra.mxu0 %v788
    %v808 = vpop.f32.mrf.mxu0
    %v809 = vadd.f32 %v753, %v808
    %v810 = vpop.f32.mrf.mxu0
    %v811 = vadd.f32 %v753, %v810
    %812 = vmatmul.bf16.gmra.mxu0 %v791
    %v813 = vpop.f32.mrf.mxu0
    %v814 = vadd.f32 %v753, %v813
    %v815 = vpop.f32.mrf.mxu0
    %v816 = vadd.f32 %v753, %v815
    %817 = vmatmul.bf16.gmra.mxu0 %v794
    %v818 = vpop.f32.mrf.mxu0
    %v819 = vadd.f32 %v753, %v818
    %v820 = vpop.f32.mrf.mxu0
    %v821 = vadd.f32 %v753, %v820
    %822 = vmatmul.bf16.gmra.mxu0 %v797
    %v823 = vpop.f32.mrf.mxu0
    %v824 = vadd.f32 %v753, %v823
    %v825 = vpop.f32.mrf.mxu0
    %v826 = vadd.f32 %v753, %v825
    %827 = vdwg.mxu0
    %828 = vst [vmem:[#allocation2] sm:$0xff] %v809
    %829 = vst [vmem:[#allocation2 + $0x8] sm:$0xff] %v811
    %830 = vst [vmem:[#allocation2 + $0x10] sm:$0xff] %v814
    %831 = vst [vmem:[#allocation2 + $0x18] sm:$0xff] %v816
    %832 = vst [vmem:[#allocation2 + $0x20] sm:$0xff] %v819
    %833 = vst [vmem:[#allocation2 + $0x28] sm:$0xff] %v821
    %834 = vst [vmem:[#allocation2 + $0x30] sm:$0xff] %v824
    %835 = vst [vmem:[#allocation2 + $0x38] sm:$0xff] %v826
    %s836 = scalar_lea.vmem [#allocation11], 16
    %v837 = vld [vmem:[%s836] sm:$0xf]
    %v838 = vld [vmem:[%s836 + $0x4] sm:$0xf]
    %v839 = vld [vmem:[%s836 + $0x8] sm:$0xf]
    %v840 = vld [vmem:[%s836 + $0xc] sm:$0xf]
    %s841 = scalar_lea.vmem [#allocation4], 8
    %v842 = vld [vmem:[%s841] sm:$0xff]
    %s843 = scalar_lea.vmem [#allocation5], 8
    %v844 = vld [vmem:[%s843] sm:$0xff]
    %v845 = vld [vmem:[#allocation2] sm:$0xff]
    %v846 = vpack.c.bf16 %v842, %v842
    %v851 = vunpack.c.l.b16 %v837
    %v852 = vunpack.c.l.b16 %v838
    %v853 = vunpack.c.l.b16 %v839
    %v854 = vunpack.c.l.b16 %v840
    %v855 = vpack.c.b16 %v852, %v851
    %v856 = vpack.c.b16 %v854, %v853
    %v860 = vsel %vm192, %v846, 0
    %862 = vmatpush.bf16.msra.mxu0 0
    %863 = vmatpush.bf16.msra.mxu0 0
    %864 = vmatpush.bf16.msra.mxu0 0
    %865 = vmatpush.bf16.msra.mxu0 0
    %866 = vmatpush.bf16.msra.mxu0 0
    %867 = vmatpush.bf16.msra.mxu0 0
    %868 = vmatpush.bf16.msra.mxu0 %v856
    %869 = vmatpush.bf16.msra.mxu0 %v855
    %870 = vmatmul.bf16.gmra.mxu0 %v860
    %v871 = vpop.f32.mrf.mxu0
    %v872 = vadd.f32 0.0, %v871
    %v873 = vpop.f32.mrf.mxu0
    %874 = vdwg.mxu0
    %v875 = vadd.f32 %v845, %v872
    %v876 = vxor.u32 %v875, 2147483648
    %v877 = vmul.f32 %v876, 1.442695
    %v878 = vpow.pop %v877
    %v879 = vadd.f32 %v878, 1.0
    %v880 = vrcp.pop %v879
    %v881 = vmul.f32 %v879, %v880
    %v882 = vsub.f32 1.0, %v881
    %v883 = vmul.f32 %v880, %v882
    %v884 = vadd.f32 %v880, %v883
    %vm885 = vweird.f32 %v879
    %vm886 = vweird.f32 %v880
    %vm887 = vmor %vm885, %vm886
    %v888 = vsel %vm887, %v880, %v884
    %v889 = vand.u32 2147483647, %v879
    %vm890 = vcmp.eq.f32.partialorder %v889, 8.507059e+37
    %v891 = vand.u32 %v879, 2147483648
    %v892 = vor.u32 1.1754944e-38, %v891
    %v893 = vsel %vm890, %v892, %v888
    %v894 = vmul.f32 1.0, %v893
    %v895 = vtanh.pop %v875
    %897 = vrot.lane.b32.xlu0 %v844, 32
    %v898 = vpop.permute.xlu0 %897
    %v900 = vmul.f32 %v894, %v898
    %902 = vrot.lane.b32.xlu0 %v895, 64
    %v903 = vpop.permute.xlu0 %902
    %v905 = vmul.f32 %v894, %v903
    %907 = vrot.lane.b32.xlu0 %v905, 32
    %v908 = vpop.permute.xlu0 %907
    %v910 = vadd.f32 %v900, %v908
    %v911 = vtanh.pop %v910
    %913 = vrot.lane.b32.xlu0 %v911, 64
    %v914 = vpop.permute.xlu0 %913
    %v916 = vmul.f32 %v894, %v914
    %v917 = vpack.c.bf16 %v916, %v916
    %919 = vrot.lane.b32.xlu0 %v917, 32
    %v920 = vpop.permute.xlu0 %919
    %922 = vst.msk [vmem:[#allocation3] sm:$0xf] %vm256, %v920
    %v923 = vld [vmem:[%s258] sm:$0xff]
    %v924 = vunpack.c.l.b16 %v917
    %v925 = vpack.c.b16 %v924, %v924
    %926 = vrot.lane.b32.xlu0 %v925, 32
    %v927 = vpop.permute.xlu0 %926
    %v929 = vsel %vm192, %v927, 0
    %931 = vmatpush.bf16.msra.mxu0 0
    %932 = vmatpush.bf16.msra.mxu0 0
    %933 = vmatpush.bf16.msra.mxu0 0
    %934 = vmatpush.bf16.msra.mxu0 0
    %935 = vmatpush.bf16.msra.mxu0 0
    %936 = vmatpush.bf16.msra.mxu0 0
    %937 = vmatpush.bf16.msra.mxu0 %v856
    %938 = vmatpush.bf16.msra.mxu0 %v855
    %939 = vmatmul.bf16.gmra.mxu0 %v929
    %v940 = vpop.f32.mrf.mxu0
    %v941 = vadd.f32 0.0, %v940
    %v942 = vpop.f32.mrf.mxu0
    %943 = vdwg.mxu0
    %v944 = vadd.f32 %v923, %v941
    %v945 = vxor.u32 %v944, 2147483648
    %v946 = vmul.f32 %v945, 1.442695
    %v947 = vpow.pop %v946
    %v948 = vadd.f32 %v947, 1.0
    %v949 = vrcp.pop %v948
    %v950 = vmul.f32 %v948, %v949
    %v951 = vsub.f32 1.0, %v950
    %v952 = vmul.f32 %v949, %v951
    %v953 = vadd.f32 %v949, %v952
    %vm954 = vweird.f32 %v948
    %vm955 = vweird.f32 %v949
    %vm956 = vmor %vm954, %vm955
    %v957 = vsel %vm956, %v949, %v953
    %v958 = vand.u32 2147483647, %v948
    %vm959 = vcmp.eq.f32.partialorder %v958, 8.507059e+37
    %v960 = vand.u32 %v948, 2147483648
    %v961 = vor.u32 1.1754944e-38, %v960
    %v962 = vsel %vm959, %v961, %v957
    %v963 = vmul.f32 1.0, %v962
    %v964 = vtanh.pop %v944
    %v965 = vmul.f32 %v963, %v910
    %967 = vrot.lane.b32.xlu0 %v964, 64
    %v968 = vpop.permute.xlu0 %967
    %v970 = vmul.f32 %v963, %v968
    %972 = vrot.lane.b32.xlu0 %v970, 32
    %v973 = vpop.permute.xlu0 %972
    %v975 = vadd.f32 %v965, %v973
    %v976 = vtanh.pop %v975
    %978 = vrot.lane.b32.xlu0 %v976, 64
    %v979 = vpop.permute.xlu0 %978
    %v981 = vmul.f32 %v963, %v979
    %v982 = vpack.c.bf16 %v981, %v981
    %984 = vrot.lane.b32.xlu0 %v982, 32
    %v985 = vpop.permute.xlu0 %984
    %987 = vst.msk [vmem:[%s323] sm:$0xf] %vm256, %v985
    %v988 = vld [vmem:[%s325] sm:$0xff]
    %v989 = vunpack.c.l.b16 %v982
    %v990 = vpack.c.b16 %v989, %v989
    %991 = vrot.lane.b32.xlu0 %v990, 32
    %v992 = vpop.permute.xlu0 %991
    %v994 = vsel %vm192, %v992, 0
    %996 = vmatpush.bf16.msra.mxu0 0
    %997 = vmatpush.bf16.msra.mxu0 0
    %998 = vmatpush.bf16.msra.mxu0 0
    %999 = vmatpush.bf16.msra.mxu0 0
    %1000 = vmatpush.bf16.msra.mxu0 0
    %1001 = vmatpush.bf16.msra.mxu0 0
    %1002 = vmatpush.bf16.msra.mxu0 %v856
    %1003 = vmatpush.bf16.msra.mxu0 %v855
    %1004 = vmatmul.bf16.gmra.mxu0 %v994
    %v1005 = vpop.f32.mrf.mxu0
    %v1006 = vadd.f32 0.0, %v1005
    %v1007 = vpop.f32.mrf.mxu0
    %1008 = vdwg.mxu0
    %v1009 = vadd.f32 %v988, %v1006
    %v1010 = vxor.u32 %v1009, 2147483648
    %v1011 = vmul.f32 %v1010, 1.442695
    %v1012 = vpow.pop %v1011
    %v1013 = vadd.f32 %v1012, 1.0
    %v1014 = vrcp.pop %v1013
    %v1015 = vmul.f32 %v1013, %v1014
    %v1016 = vsub.f32 1.0, %v1015
    %v1017 = vmul.f32 %v1014, %v1016
    %v1018 = vadd.f32 %v1014, %v1017
    %vm1019 = vweird.f32 %v1013
    %vm1020 = vweird.f32 %v1014
    %vm1021 = vmor %vm1019, %vm1020
    %v1022 = vsel %vm1021, %v1014, %v1018
    %v1023 = vand.u32 2147483647, %v1013
    %vm1024 = vcmp.eq.f32.partialorder %v1023, 8.507059e+37
    %v1025 = vand.u32 %v1013, 2147483648
    %v1026 = vor.u32 1.1754944e-38, %v1025
    %v1027 = vsel %vm1024, %v1026, %v1022
    %v1028 = vmul.f32 1.0, %v1027
    %v1029 = vtanh.pop %v1009
    %v1030 = vmul.f32 %v1028, %v975
    %1032 = vrot.lane.b32.xlu0 %v1029, 64
    %v1033 = vpop.permute.xlu0 %1032
    %v1035 = vmul.f32 %v1028, %v1033
    %1037 = vrot.lane.b32.xlu0 %v1035, 32
    %v1038 = vpop.permute.xlu0 %1037
    %v1040 = vadd.f32 %v1030, %v1038
    %v1041 = vtanh.pop %v1040
    %1043 = vrot.lane.b32.xlu0 %v1041, 64
    %v1044 = vpop.permute.xlu0 %1043
    %v1046 = vmul.f32 %v1028, %v1044
    %v1047 = vpack.c.bf16 %v1046, %v1046
    %1049 = vrot.lane.b32.xlu0 %v1047, 32
    %v1050 = vpop.permute.xlu0 %1049
    %1052 = vst.msk [vmem:[%s390] sm:$0xf] %vm256, %v1050
    %v1053 = vld [vmem:[%s392] sm:$0xff]
    %v1054 = vunpack.c.l.b16 %v1047
    %v1055 = vpack.c.b16 %v1054, %v1054
    %1056 = vrot.lane.b32.xlu0 %v1055, 32
    %v1057 = vpop.permute.xlu0 %1056
    %v1059 = vsel %vm192, %v1057, 0
    %1061 = vmatpush.bf16.msra.mxu0 0
    %1062 = vmatpush.bf16.msra.mxu0 0
    %1063 = vmatpush.bf16.msra.mxu0 0
    %1064 = vmatpush.bf16.msra.mxu0 0
    %1065 = vmatpush.bf16.msra.mxu0 0
    %1066 = vmatpush.bf16.msra.mxu0 0
    %1067 = vmatpush.bf16.msra.mxu0 %v856
    %1068 = vmatpush.bf16.msra.mxu0 %v855
    %1069 = vmatmul.bf16.gmra.mxu0 %v1059
    %v1070 = vpop.f32.mrf.mxu0
    %v1071 = vadd.f32 0.0, %v1070
    %v1072 = vpop.f32.mrf.mxu0
    %1073 = vdwg.mxu0
    %v1074 = vadd.f32 %v1053, %v1071
    %v1075 = vxor.u32 %v1074, 2147483648
    %v1076 = vmul.f32 %v1075, 1.442695
    %v1077 = vpow.pop %v1076
    %v1078 = vadd.f32 %v1077, 1.0
    %v1079 = vrcp.pop %v1078
    %v1080 = vmul.f32 %v1078, %v1079
    %v1081 = vsub.f32 1.0, %v1080
    %v1082 = vmul.f32 %v1079, %v1081
    %v1083 = vadd.f32 %v1079, %v1082
    %vm1084 = vweird.f32 %v1078
    %vm1085 = vweird.f32 %v1079
    %vm1086 = vmor %vm1084, %vm1085
    %v1087 = vsel %vm1086, %v1079, %v1083
    %v1088 = vand.u32 2147483647, %v1078
    %vm1089 = vcmp.eq.f32.partialorder %v1088, 8.507059e+37
    %v1090 = vand.u32 %v1078, 2147483648
    %v1091 = vor.u32 1.1754944e-38, %v1090
    %v1092 = vsel %vm1089, %v1091, %v1087
    %v1093 = vmul.f32 1.0, %v1092
    %v1094 = vtanh.pop %v1074
    %v1095 = vmul.f32 %v1093, %v1040
    %1097 = vrot.lane.b32.xlu0 %v1094, 64
    %v1098 = vpop.permute.xlu0 %1097
    %v1100 = vmul.f32 %v1093, %v1098
    %1102 = vrot.lane.b32.xlu0 %v1100, 32
    %v1103 = vpop.permute.xlu0 %1102
    %v1105 = vadd.f32 %v1095, %v1103
    %v1106 = vtanh.pop %v1105
    %1108 = vrot.lane.b32.xlu0 %v1106, 64
    %v1109 = vpop.permute.xlu0 %1108
    %v1111 = vmul.f32 %v1093, %v1109
    %v1112 = vpack.c.bf16 %v1111, %v1111
    %1114 = vrot.lane.b32.xlu0 %v1112, 32
    %v1115 = vpop.permute.xlu0 %1114
    %1117 = vst.msk [vmem:[%s457] sm:$0xf] %vm256, %v1115
    %v1118 = vld [vmem:[%s459] sm:$0xff]
    %v1119 = vunpack.c.l.b16 %v1112
    %v1120 = vpack.c.b16 %v1119, %v1119
    %1121 = vrot.lane.b32.xlu0 %v1120, 32
    %v1122 = vpop.permute.xlu0 %1121
    %v1124 = vsel %vm192, %v1122, 0
    %1126 = vmatpush.bf16.msra.mxu0 0
    %1127 = vmatpush.bf16.msra.mxu0 0
    %1128 = vmatpush.bf16.msra.mxu0 0
    %1129 = vmatpush.bf16.msra.mxu0 0
    %1130 = vmatpush.bf16.msra.mxu0 0
    %1131 = vmatpush.bf16.msra.mxu0 0
    %1132 = vmatpush.bf16.msra.mxu0 %v856
    %1133 = vmatpush.bf16.msra.mxu0 %v855
    %1134 = vmatmul.bf16.gmra.mxu0 %v1124
    %v1135 = vpop.f32.mrf.mxu0
    %v1136 = vadd.f32 0.0, %v1135
    %v1137 = vpop.f32.mrf.mxu0
    %1138 = vdwg.mxu0
    %v1139 = vadd.f32 %v1118, %v1136
    %v1140 = vxor.u32 %v1139, 2147483648
    %v1141 = vmul.f32 %v1140, 1.442695
    %v1142 = vpow.pop %v1141
    %v1143 = vadd.f32 %v1142, 1.0
    %v1144 = vrcp.pop %v1143
    %v1145 = vmul.f32 %v1143, %v1144
    %v1146 = vsub.f32 1.0, %v1145
    %v1147 = vmul.f32 %v1144, %v1146
    %v1148 = vadd.f32 %v1144, %v1147
    %vm1149 = vweird.f32 %v1143
    %vm1150 = vweird.f32 %v1144
    %vm1151 = vmor %vm1149, %vm1150
    %v1152 = vsel %vm1151, %v1144, %v1148
    %v1153 = vand.u32 2147483647, %v1143
    %vm1154 = vcmp.eq.f32.partialorder %v1153, 8.507059e+37
    %v1155 = vand.u32 %v1143, 2147483648
    %v1156 = vor.u32 1.1754944e-38, %v1155
    %v1157 = vsel %vm1154, %v1156, %v1152
    %v1158 = vmul.f32 1.0, %v1157
    %v1159 = vtanh.pop %v1139
    %v1160 = vmul.f32 %v1158, %v1105
    %1162 = vrot.lane.b32.xlu0 %v1159, 64
    %v1163 = vpop.permute.xlu0 %1162
    %v1165 = vmul.f32 %v1158, %v1163
    %1167 = vrot.lane.b32.xlu0 %v1165, 32
    %v1168 = vpop.permute.xlu0 %1167
    %v1170 = vadd.f32 %v1160, %v1168
    %v1171 = vtanh.pop %v1170
    %1173 = vrot.lane.b32.xlu0 %v1171, 64
    %v1174 = vpop.permute.xlu0 %1173
    %v1176 = vmul.f32 %v1158, %v1174
    %v1177 = vpack.c.bf16 %v1176, %v1176
    %1179 = vrot.lane.b32.xlu0 %v1177, 32
    %v1180 = vpop.permute.xlu0 %1179
    %1182 = vst.msk [vmem:[%s524] sm:$0xf] %vm256, %v1180
    %v1183 = vld [vmem:[%s526] sm:$0xff]
    %v1184 = vunpack.c.l.b16 %v1177
    %v1185 = vpack.c.b16 %v1184, %v1184
    %1186 = vrot.lane.b32.xlu0 %v1185, 32
    %v1187 = vpop.permute.xlu0 %1186
    %v1189 = vsel %vm192, %v1187, 0
    %1191 = vmatpush.bf16.msra.mxu0 0
    %1192 = vmatpush.bf16.msra.mxu0 0
    %1193 = vmatpush.bf16.msra.mxu0 0
    %1194 = vmatpush.bf16.msra.mxu0 0
    %1195 = vmatpush.bf16.msra.mxu0 0
    %1196 = vmatpush.bf16.msra.mxu0 0
    %1197 = vmatpush.bf16.msra.mxu0 %v856
    %1198 = vmatpush.bf16.msra.mxu0 %v855
    %1199 = vmatmul.bf16.gmra.mxu0 %v1189
    %v1200 = vpop.f32.mrf.mxu0
    %v1201 = vadd.f32 0.0, %v1200
    %v1202 = vpop.f32.mrf.mxu0
    %1203 = vdwg.mxu0
    %v1204 = vadd.f32 %v1183, %v1201
    %v1205 = vxor.u32 %v1204, 2147483648
    %v1206 = vmul.f32 %v1205, 1.442695
    %v1207 = vpow.pop %v1206
    %v1208 = vadd.f32 %v1207, 1.0
    %v1209 = vrcp.pop %v1208
    %v1210 = vmul.f32 %v1208, %v1209
    %v1211 = vsub.f32 1.0, %v1210
    %v1212 = vmul.f32 %v1209, %v1211
    %v1213 = vadd.f32 %v1209, %v1212
    %vm1214 = vweird.f32 %v1208
    %vm1215 = vweird.f32 %v1209
    %vm1216 = vmor %vm1214, %vm1215
    %v1217 = vsel %vm1216, %v1209, %v1213
    %v1218 = vand.u32 2147483647, %v1208
    %vm1219 = vcmp.eq.f32.partialorder %v1218, 8.507059e+37
    %v1220 = vand.u32 %v1208, 2147483648
    %v1221 = vor.u32 1.1754944e-38, %v1220
    %v1222 = vsel %vm1219, %v1221, %v1217
    %v1223 = vmul.f32 1.0, %v1222
    %v1224 = vtanh.pop %v1204
    %v1225 = vmul.f32 %v1223, %v1170
    %1227 = vrot.lane.b32.xlu0 %v1224, 64
    %v1228 = vpop.permute.xlu0 %1227
    %v1230 = vmul.f32 %v1223, %v1228
    %1232 = vrot.lane.b32.xlu0 %v1230, 32
    %v1233 = vpop.permute.xlu0 %1232
    %v1235 = vadd.f32 %v1225, %v1233
    %v1236 = vtanh.pop %v1235
    %1238 = vrot.lane.b32.xlu0 %v1236, 64
    %v1239 = vpop.permute.xlu0 %1238
    %v1241 = vmul.f32 %v1223, %v1239
    %v1242 = vpack.c.bf16 %v1241, %v1241
    %1244 = vrot.lane.b32.xlu0 %v1242, 32
    %v1245 = vpop.permute.xlu0 %1244
    %1247 = vst.msk [vmem:[%s591] sm:$0xf] %vm256, %v1245
    %v1248 = vld [vmem:[%s593] sm:$0xff]
    %v1249 = vunpack.c.l.b16 %v1242
    %v1250 = vpack.c.b16 %v1249, %v1249
    %1251 = vrot.lane.b32.xlu0 %v1250, 32
    %v1252 = vpop.permute.xlu0 %1251
    %v1254 = vsel %vm192, %v1252, 0
    %1256 = vmatpush.bf16.msra.mxu0 0
    %1257 = vmatpush.bf16.msra.mxu0 0
    %1258 = vmatpush.bf16.msra.mxu0 0
    %1259 = vmatpush.bf16.msra.mxu0 0
    %1260 = vmatpush.bf16.msra.mxu0 0
    %1261 = vmatpush.bf16.msra.mxu0 0
    %1262 = vmatpush.bf16.msra.mxu0 %v856
    %1263 = vmatpush.bf16.msra.mxu0 %v855
    %1264 = vmatmul.bf16.gmra.mxu0 %v1254
    %v1265 = vpop.f32.mrf.mxu0
    %v1266 = vadd.f32 0.0, %v1265
    %v1267 = vpop.f32.mrf.mxu0
    %1268 = vdwg.mxu0
    %v1269 = vadd.f32 %v1248, %v1266
    %v1270 = vxor.u32 %v1269, 2147483648
    %v1271 = vmul.f32 %v1270, 1.442695
    %v1272 = vpow.pop %v1271
    %v1273 = vadd.f32 %v1272, 1.0
    %v1274 = vrcp.pop %v1273
    %v1275 = vmul.f32 %v1273, %v1274
    %v1276 = vsub.f32 1.0, %v1275
    %v1277 = vmul.f32 %v1274, %v1276
    %v1278 = vadd.f32 %v1274, %v1277
    %vm1279 = vweird.f32 %v1273
    %vm1280 = vweird.f32 %v1274
    %vm1281 = vmor %vm1279, %vm1280
    %v1282 = vsel %vm1281, %v1274, %v1278
    %v1283 = vand.u32 2147483647, %v1273
    %vm1284 = vcmp.eq.f32.partialorder %v1283, 8.507059e+37
    %v1285 = vand.u32 %v1273, 2147483648
    %v1286 = vor.u32 1.1754944e-38, %v1285
    %v1287 = vsel %vm1284, %v1286, %v1282
    %v1288 = vmul.f32 1.0, %v1287
    %v1289 = vtanh.pop %v1269
    %v1290 = vmul.f32 %v1288, %v1235
    %1292 = vrot.lane.b32.xlu0 %v1289, 64
    %v1293 = vpop.permute.xlu0 %1292
    %v1295 = vmul.f32 %v1288, %v1293
    %1297 = vrot.lane.b32.xlu0 %v1295, 32
    %v1298 = vpop.permute.xlu0 %1297
    %v1300 = vadd.f32 %v1290, %v1298
    %v1301 = vtanh.pop %v1300
    %1303 = vrot.lane.b32.xlu0 %v1301, 64
    %v1304 = vpop.permute.xlu0 %1303
    %v1306 = vmul.f32 %v1288, %v1304
    %v1307 = vpack.c.bf16 %v1306, %v1306
    %1309 = vrot.lane.b32.xlu0 %v1307, 32
    %v1310 = vpop.permute.xlu0 %1309
    %1312 = vst.msk [vmem:[%s658] sm:$0xf] %vm256, %v1310
    %v1313 = vld [vmem:[%s660] sm:$0xff]
    %v1314 = vunpack.c.l.b16 %v1307
    %v1315 = vpack.c.b16 %v1314, %v1314
    %1316 = vrot.lane.b32.xlu0 %v1315, 32
    %v1317 = vpop.permute.xlu0 %1316
    %v1319 = vsel %vm192, %v1317, 0
    %1321 = vmatpush.bf16.msra.mxu0 0
    %1322 = vmatpush.bf16.msra.mxu0 0
    %1323 = vmatpush.bf16.msra.mxu0 0
    %1324 = vmatpush.bf16.msra.mxu0 0
    %1325 = vmatpush.bf16.msra.mxu0 0
    %1326 = vmatpush.bf16.msra.mxu0 0
    %1327 = vmatpush.bf16.msra.mxu0 %v856
    %1328 = vmatpush.bf16.msra.mxu0 %v855
    %1329 = vmatmul.bf16.gmra.mxu0 %v1319
    %v1330 = vpop.f32.mrf.mxu0
    %v1331 = vadd.f32 0.0, %v1330
    %v1332 = vpop.f32.mrf.mxu0
    %1333 = vdwg.mxu0
    %v1334 = vadd.f32 %v1313, %v1331
    %v1335 = vxor.u32 %v1334, 2147483648
    %v1336 = vmul.f32 %v1335, 1.442695
    %v1337 = vpow.pop %v1336
    %v1338 = vadd.f32 %v1337, 1.0
    %v1339 = vrcp.pop %v1338
    %v1340 = vmul.f32 %v1338, %v1339
    %v1341 = vsub.f32 1.0, %v1340
    %v1342 = vmul.f32 %v1339, %v1341
    %v1343 = vadd.f32 %v1339, %v1342
    %vm1344 = vweird.f32 %v1338
    %vm1345 = vweird.f32 %v1339
    %vm1346 = vmor %vm1344, %vm1345
    %v1347 = vsel %vm1346, %v1339, %v1343
    %v1348 = vand.u32 2147483647, %v1338
    %vm1349 = vcmp.eq.f32.partialorder %v1348, 8.507059e+37
    %v1350 = vand.u32 %v1338, 2147483648
    %v1351 = vor.u32 1.1754944e-38, %v1350
    %v1352 = vsel %vm1349, %v1351, %v1347
    %v1353 = vmul.f32 1.0, %v1352
    %v1354 = vtanh.pop %v1334
    %v1355 = vmul.f32 %v1353, %v1300
    %1357 = vrot.lane.b32.xlu0 %v1354, 64
    %v1358 = vpop.permute.xlu0 %1357
    %v1360 = vmul.f32 %v1353, %v1358
    %1362 = vrot.lane.b32.xlu0 %v1360, 32
    %v1363 = vpop.permute.xlu0 %1362
    %v1365 = vadd.f32 %v1355, %v1363
    %v1366 = vtanh.pop %v1365
    %1368 = vrot.lane.b32.xlu0 %v1366, 64
    %v1369 = vpop.permute.xlu0 %1368
    %v1371 = vmul.f32 %v1353, %v1369
    %v1372 = vpack.c.bf16 %v1371, %v1371
    %1374 = vrot.lane.b32.xlu0 %v1372, 32
    %v1375 = vpop.permute.xlu0 %1374
    %1377 = vst.msk [vmem:[%s725] sm:$0xf] %vm256, %v1375
    %1379 = vrot.lane.b32.xlu0 %v1371, 32
    %v1380 = vpop.permute.xlu0 %1379
    %1382 = vst.msk [vmem:[%s841] sm:$0xff] %vm192, %v1380
    %1384 = vrot.lane.b32.xlu0 %v1365, 96
    %v1385 = vpop.permute.xlu0 %1384
    %1387 = vst.msk [vmem:[%s843] sm:$0xff] %vm192, %v1385
    // Predicated region
    $region42: #{tpu_custom_call.1} parent=1 // pred_check
      %p1388 = pneg %p73
    $region43: #{tpu_custom_call.1} parent=1 // pred_check_branch
      %1390 = sbr.rel (%p1388) target = $region45
    $region44: #{tpu_custom_call.1} parent=1 // pred_region
      %v1391 = vld [vmem:[%s841] sm:$0xff]
      %v1392 = vld [vmem:[%s4] sm:$0x1]
      %v1394 = vperm.slane %v1392, 0
      %v1396 = vmul.f32 %v1391, %v1394
      %v1397 = vsel %vm192, %v1396, 0.0
      %1398 = vadd.xlane.f32.xlu0 %v1397
      %v1399 = vpop.xlane.xlu0 %1398
      %v1400 = vld [vmem:[#allocation6] sm:$0x1]
      %v1402 = vperm.slane %v1400, 0
      %v1404 = vadd.f32 %v1399, %v1402
      %vm1405 = vcmask 7168
      %1406 = vst.msk [vmem:[%s6] sm:$0xff] %vm1405, %v1404
    $region45: #{tpu_custom_call.1} parent=1 // pred_fallthru
      _
    // Predicated region
    $region46: #{tpu_custom_call.1} parent=1 // pred_check
      _
    $region47: #{tpu_custom_call.1} parent=1 // pred_check_branch
      %1408 = sbr.rel (0) target = $region49
    $region48: #{tpu_custom_call.1} parent=1 // pred_region
      _
    $region49: #{tpu_custom_call.1} parent=1 // pred_fallthru
      _
    // Predicated region
    $region50: #{tpu_custom_call.1} parent=1 // pred_check
      _
    $region51: #{tpu_custom_call.1} parent=1 // pred_check_branch
      %1410 = sbr.rel (0) target = $region53
    $region52: #{tpu_custom_call.1} parent=1 // pred_region
      _
    $region53: #{tpu_custom_call.1} parent=1 // pred_fallthru
      _
    %1411 = vsyncpa [#allocation8], 1
    %1412 = vsyncpa [#allocation10], 1

</llo_original>
